<compile_context>
chip_gen: v5e
topology: v5e:2x2
jax: 0.10.0
libtpu: 0.0.40
codegen_flags: <defaults>
</compile_context>

<pallas_src>
import math
from functools import partial

import numpy as np
import jax
import jax.numpy as jnp
from jax.experimental import pallas as pl
from jax.experimental.pallas import tpu as pltpu

GN_GROUPS = 32          # `gn = 32` in the PyTorch file
_CHUNK = 128            # in-kernel GEMM row chunk (keeps operands in vregs)


def _ceil_to(v, m):
    return ((v + m - 1) // m) * m


_P_CACHE = {}


def _p_matrix(C, groups):
    """0/1 group-membership matrix (C, C): dot(v, P) = per-group sums, broadcast."""
    key = (C, groups)
    if key not in _P_CACHE:
        cg = C // groups
        idx = np.arange(C) // cg
        _P_CACHE[key] = (idx[:, None] == idx[None, :]).astype(np.float32)
    return jnp.asarray(_P_CACHE[key], dtype=jnp.bfloat16)


def _div_tile(hw):
    for t in (1024, 512, 256, 128, 64, 32, 16, 8):
        if hw % t == 0:
            return t
    return None


# ----------------------------------------------------------------------------
# Pallas kernels
# ----------------------------------------------------------------------------
def _gemm_kernel(a_ref, b_ref, bias_ref, o_ref):
    rows = a_ref.shape[0]
    chunk = _CHUNK if rows % _CHUNK == 0 else rows
    for r0 in range(0, rows, chunk):
        a = a_ref[pl.ds(r0, chunk), :].astype(jnp.bfloat16)
        acc = jnp.dot(a, b_ref[...], preferred_element_type=jnp.float32)
        o_ref[pl.ds(r0, chunk), :] = (acc + bias_ref[...]).astype(o_ref.dtype)


def _gemm_res_kernel(a_ref, b_ref, bias_ref, r_ref, o_ref):
    rows = a_ref.shape[0]
    chunk = _CHUNK if rows % _CHUNK == 0 else rows
    for r0 in range(0, rows, chunk):
        a = a_ref[pl.ds(r0, chunk), :].astype(jnp.bfloat16)
        acc = jnp.dot(a, b_ref[...], preferred_element_type=jnp.float32)
        acc = acc + bias_ref[...] + r_ref[pl.ds(r0, chunk), :].astype(jnp.float32)
        o_ref[pl.ds(r0, chunk), :] = acc.astype(o_ref.dtype)


def _gemm_gn_kernel(a_ref, sc_ref, sh_ref, b_ref, bias_ref, o_ref, *, relu):
    rows = a_ref.shape[0]
    chunk = _CHUNK if rows % _CHUNK == 0 else rows
    scale = sc_ref[0:1, :]
    shift = sh_ref[0:1, :]
    for r0 in range(0, rows, chunk):
        a = a_ref[pl.ds(r0, chunk), :].astype(jnp.float32) * scale + shift
        if relu:
            a = jnp.maximum(a, 0.0)
        acc = jnp.dot(a.astype(jnp.bfloat16), b_ref[...],
                      preferred_element_type=jnp.float32)
        o_ref[pl.ds(r0, chunk), :] = (acc + bias_ref[...]).astype(o_ref.dtype)


def _gemm_gn_res_kernel(a_ref, sc_ref, sh_ref, b_ref, bias_ref, r_ref, o_ref, *, relu):
    rows = a_ref.shape[0]
    chunk = _CHUNK if rows % _CHUNK == 0 else rows
    scale = sc_ref[0:1, :]
    shift = sh_ref[0:1, :]
    for r0 in range(0, rows, chunk):
        a = a_ref[pl.ds(r0, chunk), :].astype(jnp.float32) * scale + shift
        if relu:
            a = jnp.maximum(a, 0.0)
        acc = jnp.dot(a.astype(jnp.bfloat16), b_ref[...],
                      preferred_element_type=jnp.float32)
        acc = acc + bias_ref[...] + r_ref[pl.ds(r0, chunk), :].astype(jnp.float32)
        o_ref[pl.ds(r0, chunk), :] = acc.astype(o_ref.dtype)


def _conv3x3_kernel(x_ref, w_ref, b_ref, o_ref, *, th, wo):
    # x_ref: (1, H+2, W+2, C) resident padded per-sample input (bf16)
    # w_ref: (9, C, O) bf16 taps; b_ref: (1, O) f32; o_ref: (th*W, O) bf16
    i = pl.program_id(1)
    row0 = i * th
    acc = None
    for kh in range(3):
        for kw in range(3):
            a = x_ref[0, pl.ds(row0 + kh, th), pl.ds(kw, wo), :]
            a = a.reshape(th * wo, a.shape[-1]).astype(jnp.bfloat16)
            d = jnp.dot(a, w_ref[kh * 3 + kw], preferred_element_type=jnp.float32)
            acc = d if acc is None else acc + d
    o_ref[...] = (acc + b_ref[...]).astype(o_ref.dtype)


def _group_scale_shift(s, ss, p_ref, g_ref, b_ref, cnt, eps):
    # per-group sums via 0/1 matrix matmul; hi/lo split keeps ~f32 accuracy
    def gsum(v):
        hi = v.astype(jnp.bfloat16)
        lo = (v - hi.astype(jnp.float32)).astype(jnp.bfloat16)
        return (jnp.dot(hi, p_ref[...], preferred_element_type=jnp.float32)
                + jnp.dot(lo, p_ref[...], preferred_element_type=jnp.float32))
    mean = gsum(s) / cnt
    var = jnp.maximum(gsum(ss) / cnt - mean * mean, 0.0)
    inv = jax.lax.rsqrt(var + eps)
    scale = inv * g_ref[...]
    shift = b_ref[...] - mean * scale
    return scale, shift


def _gn_kernel(x_ref, p_ref, g_ref, b_ref, o_ref, *, hw, cg, eps, relu):
    rows, C = x_ref.shape
    chunk = 256 if rows % 256 == 0 else rows
    s = jnp.zeros((1, C), jnp.float32)
    ss = jnp.zeros((1, C), jnp.float32)
    for r0 in range(0, rows, chunk):
        xx = x_ref[pl.ds(r0, chunk), :].astype(jnp.float32)
        s = s + jnp.sum(xx, axis=0, keepdims=True)
        ss = ss + jnp.sum(xx * xx, axis=0, keepdims=True)
    scale, shift = _group_scale_shift(s, ss, p_ref, g_ref, b_ref, float(hw * cg), eps)
    for r0 in range(0, rows, chunk):
        y = x_ref[pl.ds(r0, chunk), :].astype(jnp.float32) * scale + shift
        if relu:
            y = jnp.maximum(y, 0.0)
        o_ref[pl.ds(r0, chunk), :] = y.astype(o_ref.dtype)


def _gn_stats_kernel(x_ref, p_ref, g_ref, b_ref, scale_ref, shift_ref, *, hw, cg, eps):
    rows, C = x_ref.shape
    chunk = 256 if rows % 256 == 0 else rows
    s = jnp.zeros((1, C), jnp.float32)
    ss = jnp.zeros((1, C), jnp.float32)
    for r0 in range(0, rows, chunk):
        xx = x_ref[pl.ds(r0, chunk), :].astype(jnp.float32)
        s = s + jnp.sum(xx, axis=0, keepdims=True)
        ss = ss + jnp.sum(xx * xx, axis=0, keepdims=True)
    scale, shift = _group_scale_shift(s, ss, p_ref, g_ref, b_ref, float(hw * cg), eps)
    scale_ref[...] = jnp.broadcast_to(scale, scale_ref.shape)
    shift_ref[...] = jnp.broadcast_to(shift, shift_ref.shape)


def _maxpool_kernel(x_ref, o_ref):
    v = x_ref[...]                               # (t, 2, Wo, 2C)
    m = jnp.maximum(v[:, 0], v[:, 1])            # row-pair max -> (t, Wo, 2C)
    c = m.shape[-1] // 2
    o_ref[...] = jnp.maximum(m[..., :c], m[..., c:])   # column-pair max


def _upsample_add_kernel(up_ref, low_ref, o_ref):
    u = up_ref[...]                              # (t, 2, wl, 2C)
    low = low_ref[...]                           # (t, wl, C)
    l2 = jnp.concatenate([low, low], axis=-1)    # (t, wl, 2C): W-direction repeat
    o_ref[...] = u + l2[:, None, :, :]           # H-direction repeat via broadcast


def _mean_kernel(x_ref, o_ref):
    o_ref[...] = jnp.mean(x_ref[...], axis=1, keepdims=True)


def _erase_kernel(att_ref, score_ref, o_ref, *, threshold):
    a = att_ref[...]                             # (N, HW, 1)
    mn = jnp.min(a, axis=1, keepdims=True)
    mx = jnp.max(a, axis=1, keepdims=True)
    normed = (a - mn) / jnp.maximum(mx - mn, 1e-8)
    mask = jnp.where(normed >= threshold, 0.0, 1.0)
    o_ref[...] = score_ref[...] * mask


# ----------------------------------------------------------------------------
# Pallas-backed primitives
# ----------------------------------------------------------------------------
def _gemm(a, b_bf16, bias_row, residual=None, out_dtype=jnp.bfloat16):
    """A[M,K] @ B[K,O] + bias (+ residual); bf16 MXU, f32 accumulation."""
    M, K = a.shape
    O = b_bf16.shape[1]
    if M >= 512:
        tm = min(1024, _ceil_to(M // 2, 8))      # big tiles, but >= 2 grid steps
    else:
        tm = _ceil_to(max(M, 8), 8)
    Mp = _ceil_to(M, tm)
    pad = Mp - M
    a_p = jnp.pad(a, ((0, pad), (0, 0))) if pad else a
    ins = [a_p, b_bf16, bias_row]
    in_specs = [
        pl.BlockSpec((tm, K), lambda i: (i, 0)),
        pl.BlockSpec((K, O), lambda i: (0, 0)),
        pl.BlockSpec((1, O), lambda i: (0, 0)),
    ]
    kernel = _gemm_kernel
    if residual is not None:
        r_p = jnp.pad(residual, ((0, pad), (0, 0))) if pad else residual
        ins.append(r_p)
        in_specs.append(pl.BlockSpec((tm, O), lambda i: (i, 0)))
        kernel = _gemm_res_kernel
    out = pl.pallas_call(
        kernel,
        grid=(Mp // tm,),
        in_specs=in_specs,
        out_specs=pl.BlockSpec((tm, O), lambda i: (i, 0)),
        out_shape=jax.ShapeDtypeStruct((Mp, O), out_dtype),
        compiler_params=pltpu.CompilerParams(dimension_semantics=("parallel",)),
    )(*ins)
    return out[:M] if pad else out


@partial(jax.jit, static_argnames=("out_dtype",))
def conv1x1(x, w, b, residual=None, out_dtype=jnp.bfloat16):
    """x: (N,H,W,C) NHWC; w: (O,C,1,1); optional residual (N,H,W,O) fused."""
    N, H, W, C = x.shape
    O = w.shape[0]
    a = x.reshape(N * H * W, C)
    bmat = w.reshape(O, C).T.astype(jnp.bfloat16)
    r = None if residual is None else residual.reshape(N * H * W, O)
    out = _gemm(a, bmat, b.reshape(1, O).astype(jnp.float32), r, out_dtype)
    return out.reshape(N, H, W, O)


@partial(jax.jit, static_argnames=("groups", "eps"))
def gn_stats(x, gamma, beta, groups=GN_GROUPS, eps=1e-5):
    """Per-(sample, channel) GroupNorm scale/shift rows (for GN->conv fusion)."""
    N, H, W, C = x.shape
    HW = H * W                                    # caller guarantees HW % 8 == 0
    x2 = x.reshape(N * HW, C)
    P = _p_matrix(C, groups)
    g2 = gamma.reshape(1, C).astype(jnp.float32)
    b2 = beta.reshape(1, C).astype(jnp.float32)
    scale, shift = pl.pallas_call(
        partial(_gn_stats_kernel, hw=HW, cg=C // groups, eps=eps),
        grid=(N,),
        in_specs=[pl.BlockSpec((HW, C), lambda n: (n, 0)),
                  pl.BlockSpec((C, C), lambda n: (0, 0)),
                  pl.BlockSpec((1, C), lambda n: (0, 0)),
                  pl.BlockSpec((1, C), lambda n: (0, 0))],
        out_specs=(pl.BlockSpec((8, C), lambda n: (n, 0)),
                   pl.BlockSpec((8, C), lambda n: (n, 0))),
        out_shape=(jax.ShapeDtypeStruct((N * 8, C), jnp.float32),
                   jax.ShapeDtypeStruct((N * 8, C), jnp.float32)),
        compiler_params=pltpu.CompilerParams(dimension_semantics=("parallel",)),
    )(x2, P, g2, b2)
    return scale, shift


@partial(jax.jit, static_argnames=("relu",))
def conv1x1_gn(x, scale, shift, w, b, relu=True, residual=None):
    """Fused GroupNorm(+ReLU) -> 1x1 conv (+ residual).  x is the pre-norm input."""
    N, H, W, C = x.shape
    O = w.shape[0]
    HW = H * W
    tm = _div_tile(HW)
    assert tm is not None
    steps = HW // tm
    a = x.reshape(N * HW, C)
    bmat = w.reshape(O, C).T.astype(jnp.bfloat16)
    bias = b.reshape(1, O).astype(jnp.float32)
    ins = [a, scale, shift, bmat, bias]
    in_specs = [
        pl.BlockSpec((tm, C), lambda n, i: (n * steps + i, 0)),
        pl.BlockSpec((8, C), lambda n, i: (n, 0)),
        pl.BlockSpec((8, C), lambda n, i: (n, 0)),
        pl.BlockSpec((C, O), lambda n, i: (0, 0)),
        pl.BlockSpec((1, O), lambda n, i: (0, 0)),
    ]
    kernel = partial(_gemm_gn_kernel, relu=relu)
    if residual is not None:
        ins.append(residual.reshape(N * HW, O))
        in_specs.append(pl.BlockSpec((tm, O), lambda n, i: (n * steps + i, 0)))
        kernel = partial(_gemm_gn_res_kernel, relu=relu)
    out = pl.pallas_call(
        kernel,
        grid=(N, steps),
        in_specs=in_specs,
        out_specs=pl.BlockSpec((tm, O), lambda n, i: (n * steps + i, 0)),
        out_shape=jax.ShapeDtypeStruct((N * HW, O), jnp.bfloat16),
        compiler_params=pltpu.CompilerParams(
            dimension_semantics=("parallel", "parallel")),
    )(*ins)
    return out.reshape(N, H, W, O)


def _conv_im2col(x, w, b, stride, padding, out_dtype=jnp.bfloat16):
    """General conv via bf16 im2col GEMM (stem 7x7 conv + tiny 3x3 fallback)."""
    N, H, W, C = x.shape
    O, _, KH, KW = w.shape
    Ho = (H + 2 * padding - KH) // stride + 1
    Wo = (W + 2 * padding - KW) // stride + 1
    xp = jnp.pad(x.astype(jnp.bfloat16),
                 ((0, 0), (padding, padding), (padding, padding), (0, 0)))
    cols = []
    for kh in range(KH):
        for kw in range(KW):
            cols.append(
                xp[:, kh:kh + stride * Ho:stride, kw:kw + stride * Wo:stride, :])
    patches = jnp.concatenate(cols, axis=-1)                # bf16 (N,Ho,Wo,KH*KW*C)
    a = patches.reshape(N * Ho * Wo, KH * KW * C)
    bmat = jnp.transpose(w, (2, 3, 1, 0)).reshape(KH * KW * C, O).astype(jnp.bfloat16)
    out = _gemm(a, bmat, b.reshape(1, O).astype(jnp.float32), None, out_dtype)
    return out.reshape(N, Ho, Wo, O)


@partial(jax.jit, static_argnames=("stride", "padding"))
def conv_im2col(x, w, b, stride=1, padding=0):
    return _conv_im2col(x, w, b, stride, padding)


@jax.jit
def conv3x3(x, w, b):
    """3x3 / stride 1 / pad 1 convolution, NHWC, fused-tap Pallas kernel."""
    N, H, W, C = x.shape
    O = w.shape[0]
    th = min(H, max(1, 256 // W))                           # rows per grid step
    if W % 8 != 0 or H < 8 or H % th != 0:                  # tiny deep levels
        return _conv_im2col(x, w, b, stride=1, padding=1)
    xp = jnp.pad(x, ((0, 0), (1, 1), (1, 1), (0, 0)))       # bf16 pad (TODO above)
    wt = jnp.transpose(w, (2, 3, 1, 0)).reshape(9, C, O).astype(jnp.bfloat16)
    brow = b.reshape(1, O).astype(jnp.float32)
    Hp, Wp = H + 2, W + 2
    steps = H // th
    out = pl.pallas_call(
        partial(_conv3x3_kernel, th=th, wo=W),
        grid=(N, steps),
        in_specs=[
            pl.BlockSpec((1, Hp, Wp, C), lambda n, i: (n, 0, 0, 0)),
            pl.BlockSpec((9, C, O), lambda n, i: (0, 0, 0)),
            pl.BlockSpec((1, O), lambda n, i: (0, 0)),
        ],
        out_specs=pl.BlockSpec((th * W, O), lambda n, i: (n * steps + i, 0)),
        out_shape=jax.ShapeDtypeStruct((N * H * W, O), jnp.bfloat16),
        compiler_params=pltpu.CompilerParams(
            dimension_semantics=("parallel", "arbitrary")),
    )(xp, wt, brow)
    return out.reshape(N, H, W, O)


@partial(jax.jit, static_argnames=("groups", "eps", "relu"))
def group_norm(x, gamma, beta, groups=GN_GROUPS, eps=1e-5, relu=False):
    """Standalone GroupNorm(+ReLU) over NHWC activations; one grid step / sample."""
    N, H, W, C = x.shape
    HW = H * W
    hwp = _ceil_to(HW, 8)
    x2 = x.reshape(N, HW, C)
    if hwp != HW:
        x2 = jnp.pad(x2, ((0, 0), (0, hwp - HW), (0, 0)))
    x2 = x2.reshape(N * hwp, C)
    P = _p_matrix(C, groups)
    g2 = gamma.reshape(1, C).astype(jnp.float32)
    b2 = beta.reshape(1, C).astype(jnp.float32)
    out = pl.pallas_call(
        partial(_gn_kernel, hw=HW, cg=C // groups, eps=eps, relu=relu),
        grid=(N,),
        in_specs=[pl.BlockSpec((hwp, C), lambda n: (n, 0)),
                  pl.BlockSpec((C, C), lambda n: (0, 0)),
                  pl.BlockSpec((1, C), lambda n: (0, 0)),
                  pl.BlockSpec((1, C), lambda n: (0, 0))],
        out_specs=pl.BlockSpec((hwp, C), lambda n: (n, 0)),
        out_shape=jax.ShapeDtypeStruct((N * hwp, C), jnp.bfloat16),
        compiler_params=pltpu.CompilerParams(dimension_semantics=("parallel",)),
    )(x2, P, g2, b2)
    out = out.reshape(N, hwp, C)
    if hwp != HW:
        out = out[:, :HW]
    return out.reshape(N, H, W, C)


def _row_tile(rows, inner_elems):
    t = max(1, min(rows, 16384 // max(1, inner_elems)))
    t = 1 << (t.bit_length() - 1)
    while rows % t:
        t //= 2
    return t


@jax.jit
def maxpool2(x):
    """NHWC 2x2/stride-2 max-pool in one kernel (free (N*Ho,2,Wo,2C) view)."""
    N, H, W, C = x.shape
    Ho, Wo = H // 2, W // 2
    xv = x.reshape(N * Ho, 2, Wo, 2 * C)
    rows = N * Ho
    t = _row_tile(rows, Wo * C)
    out = pl.pallas_call(
        _maxpool_kernel,
        grid=(rows // t,),
        in_specs=[pl.BlockSpec((t, 2, Wo, 2 * C), lambda i: (i, 0, 0, 0))],
        out_specs=pl.BlockSpec((t, Wo, C), lambda i: (i, 0, 0)),
        out_shape=jax.ShapeDtypeStruct((N * Ho, Wo, C), x.dtype),
        compiler_params=pltpu.CompilerParams(dimension_semantics=("parallel",)),
    )(xv)
    return out.reshape(N, Ho, Wo, C)


@jax.jit
def upsample_add(up1, low3):
    """up1 + 2x nearest upsample(low3), fused (no HBM copy of the upsample)."""
    N, H, W, C = up1.shape
    hl, wl = H // 2, W // 2
    upv = up1.reshape(N * hl, 2, wl, 2 * C)
    lowv = low3.reshape(N * hl, wl, C)
    rows = N * hl
    t = _row_tile(rows, wl * C)
    out = pl.pallas_call(
        _upsample_add_kernel,
        grid=(rows // t,),
        in_specs=[pl.BlockSpec((t, 2, wl, 2 * C), lambda i: (i, 0, 0, 0)),
                  pl.BlockSpec((t, wl, C), lambda i: (i, 0, 0))],
        out_specs=pl.BlockSpec((t, 2, wl, 2 * C), lambda i: (i, 0, 0, 0)),
        out_shape=jax.ShapeDtypeStruct((N * hl, 2, wl, 2 * C), up1.dtype),
        compiler_params=pltpu.CompilerParams(dimension_semantics=("parallel",)),
    )(upv, lowv)
    return out.reshape(N, H, W, C)


@jax.jit
def spatial_mean(score):
    N, H, W, K = score.shape
    x2 = score.reshape(N, H * W, K)
    out = pl.pallas_call(
        _mean_kernel,
        out_shape=jax.ShapeDtypeStruct((N, 1, K), score.dtype),
    )(x2)
    return out.reshape(N, K)


@partial(jax.jit, static_argnames=("threshold",))
def attend_and_erase(score, label, threshold):
    """get_atten_map(normalize=True) + erase_feature_maps (NHWC score)."""
    N, H, W, K = score.shape
    sc2 = score.reshape(N, H * W, K)
    att = jnp.take_along_axis(
        sc2, label.reshape(N, 1, 1).astype(jnp.int32), axis=2)   # (N, HW, 1)
    out = pl.pallas_call(
        partial(_erase_kernel, threshold=threshold),
        out_shape=jax.ShapeDtypeStruct(sc2.shape, score.dtype),
    )(att, sc2)
    return out.reshape(N, H, W, K)


# ----------------------------------------------------------------------------
# Parameter construction (deterministic, in-script)
# ----------------------------------------------------------------------------
class Init:
    def __init__(self, seed=0):
        self.key = jax.random.PRNGKey(seed)

    def _next(self):
        self.key, sub = jax.random.split(self.key)
        return sub

    def conv(self, o, c, kh, kw):
        fan_in = c * kh * kw
        w = jax.random.normal(self._next(), (o, c, kh, kw), jnp.float32) / math.sqrt(fan_in)
        b = jnp.zeros((o,), jnp.float32)
        return {"w": w, "b": b}

    def gn(self, c):
        return {"g": jnp.ones((c,), jnp.float32), "b": jnp.zeros((c,), jnp.float32)}


def init_bottleneck(init, inplanes, planes, downsample):
    return {
        "gn1": init.gn(inplanes), "conv1": init.conv(planes, inplanes, 1, 1),
        "gn2": init.gn(planes),   "conv2": init.conv(planes, planes, 3, 3),
        "gn3": init.gn(planes),   "conv3": init.conv(planes * 2, planes, 1, 1),
        "down": init.conv(planes * 2, inplanes, 1, 1) if downsample else None,
    }


def bottleneck_fwd(p, x):
    N, H, W, C = x.shape
    fused = (H * W) % 8 == 0
    if fused:
        # GN1+ReLU fused into conv1; GN3+ReLU fused into conv3 (+ residual add)
        sc1, sh1 = gn_stats(x, p["gn1"]["g"], p["gn1"]["b"])
        out = conv1x1_gn(x, sc1, sh1, p["conv1"]["w"], p["conv1"]["b"], relu=True)
        out = group_norm(out, p["gn2"]["g"], p["gn2"]["b"], relu=True)
        out = conv3x3(out, p["conv2"]["w"], p["conv2"]["b"])
        sc3, sh3 = gn_stats(out, p["gn3"]["g"], p["gn3"]["b"])
        residual = x if p["down"] is None else conv1x1(x, p["down"]["w"], p["down"]["b"])
        return conv1x1_gn(out, sc3, sh3, p["conv3"]["w"], p["conv3"]["b"],
                          relu=True, residual=residual)
    out = group_norm(x, p["gn1"]["g"], p["gn1"]["b"], relu=True)
    out = conv1x1(out, p["conv1"]["w"], p["conv1"]["b"])
    out = group_norm(out, p["gn2"]["g"], p["gn2"]["b"], relu=True)
    out = conv3x3(out, p["conv2"]["w"], p["conv2"]["b"])
    out = group_norm(out, p["gn3"]["g"], p["gn3"]["b"], relu=True)
    residual = x if p["down"] is None else conv1x1(x, p["down"]["w"], p["down"]["b"])
    return conv1x1(out, p["conv3"]["w"], p["conv3"]["b"], residual=residual)


def seq_fwd(blocks, x):
    for b in blocks:
        x = bottleneck_fwd(b, x)
    return x


def make_residual_net(init, state, planes, blocks):
    layers = []
    downsample = state["inplanes"] != planes * 2
    layers.append(init_bottleneck(init, state["inplanes"], planes, downsample))
    state["inplanes"] = planes * 2
    for _ in range(1, blocks):
        layers.append(init_bottleneck(init, state["inplanes"], planes, False))
    return layers


def init_hourglass(init, num_blocks, planes, depth):
    def make_res():
        return [init_bottleneck(init, planes * 2, planes, False) for _ in range(num_blocks)]

    hg = []
    for i in range(depth):
        res = [make_res() for _ in range(3)]
        if i == 0:
            res.append(make_res())
        hg.append(res)
    return hg


def hourglass_fwd(hg, n, x):
    up1 = seq_fwd(hg[n - 1][0], x)
    low1 = maxpool2(x)
    low1 = seq_fwd(hg[n - 1][1], low1)
    if n > 1:
        low2 = hourglass_fwd(hg, n - 1, low1)
    else:
        low2 = seq_fwd(hg[n - 1][3], low1)
    low3 = seq_fwd(hg[n - 1][2], low2)
    return upsample_add(up1, low3)


def init_hourglassnet(seed=0, num_stacks=2, num_blocks=1, num_classes=16):
    init = Init(seed)
    state = {"inplanes": 64}
    num_feats = 128
    params = {"num_stacks": num_stacks, "num_classes": num_classes}
    params["conv1"] = init.conv(64, 3, 7, 7)
    params["bn1"] = init.gn(64)
    params["layer1"] = make_residual_net(init, state, state["inplanes"], 1)   # planes=64
    params["layer2"] = make_residual_net(init, state, state["inplanes"], 1)   # planes=128
    params["layer3"] = make_residual_net(init, state, num_feats, 1)           # planes=128
    ch = num_feats * 2
    params["hg"], params["res"], params["fc"] = [], [], []
    params["score"], params["fc_"], params["score_"] = [], [], []
    for i in range(num_stacks):
        params["hg"].append(init_hourglass(init, num_blocks, num_feats, 4))
        params["res"].append(make_residual_net(init, state, num_feats, num_blocks))
        params["fc"].append({"conv": init.conv(ch, ch, 1, 1), "gn": init.gn(ch)})
        params["score"].append(init.conv(num_classes, ch, 1, 1))
        if i < num_stacks - 1:
            params["fc_"].append(init.conv(ch, ch, 1, 1))
            params["score_"].append(init.conv(ch, num_classes, 1, 1))
    return params


def hourglassnet_forward(params, x_nchw, label, threshold=0.6):
    num_stacks = params["num_stacks"]
    x = jnp.transpose(x_nchw, (0, 2, 3, 1)).astype(jnp.bfloat16)   # NCHW -> NHWC, bf16
    x = conv_im2col(x, params["conv1"]["w"], params["conv1"]["b"], stride=2, padding=3)
    x = group_norm(x, params["bn1"]["g"], params["bn1"]["b"], relu=True)
    x = seq_fwd(params["layer1"], x)
    x = maxpool2(x)
    x = seq_fwd(params["layer2"], x)
    x = seq_fwd(params["layer3"], x)
    x = maxpool2(x)

    out = []
    for i in range(num_stacks):
        y = hourglass_fwd(params["hg"][i], 4, x)
        y = seq_fwd(params["res"][i], y)
        y = conv1x1(y, params["fc"][i]["conv"]["w"], params["fc"][i]["conv"]["b"])
        y = group_norm(y, params["fc"][i]["gn"]["g"], params["fc"][i]["gn"]["b"], relu=True)
        score = conv1x1(y, params["score"][i]["w"], params["score"][i]["b"],
                        out_dtype=jnp.float32)
        logits = spatial_mean(score)                    # mean over H then W
        score_erased = attend_and_erase(score, label, threshold)
        out.append(logits)
        if i < num_stacks - 1:
            # x = x + fc_(y) + score_(score_erased), adds fused into GEMM epilogues
            t = conv1x1(y, params["fc_"][i]["w"], params["fc_"][i]["b"], residual=x)
            x = conv1x1(score_erased, params["score_"][i]["w"], params["score_"][i]["b"],
                        residual=t)
    return out


# ----------------------------------------------------------------------------
if __name__ == "__main__":
    key = jax.random.PRNGKey(0)
    kx, kl = jax.random.split(key)
    # depth-4 hourglass needs the hourglass input (H/8) >= 16  ->  H = 128
    x = jax.random.normal(kx, (2, 3, 128, 128), jnp.float32)
    label = jax.random.randint(kl, (2,), 0, 16, dtype=jnp.int32)

    params = init_hourglassnet(seed=0, num_stacks=2, num_blocks=1, num_classes=16)
    outs = hourglassnet_forward(params, x, label, threshold=0.6)

    for o in outs:
        jax.block_until_ready(o)
    assert len(outs) == 2 and outs[0].shape == (2, 16) and outs[1].shape == (2, 16)
    print("KERNEL_OK")
</pallas_src>

<mosaic_0001>
module attributes {stable_mosaic.version = 11 : i64} {
  func.func @_gemm_kernel(%arg0: i32, %arg1: memref<1024x147xbf16, #tpu.memory_space<vmem>>, %arg2: memref<147x64xbf16, #tpu.memory_space<vmem>>, %arg3: memref<1x64xf32, #tpu.memory_space<vmem>>, %arg4: memref<1024x64xbf16, #tpu.memory_space<vmem>>) attributes {dimension_semantics = [#tpu.dimension_semantics<parallel>], iteration_bounds = array<i64: 8>, scalar_prefetch = 0 : i64, scratch_operands = 0 : i64, tpu.core_type = #tpu.core_type<tc>, window_params = [{transform_indices = @transform_0, window_bounds = array<i64: 1024, 147>}, {pipeline_mode = #tpu.pipeline_mode<synchronous>, transform_indices = @transform_1, window_bounds = array<i64: 147, 64>}, {pipeline_mode = #tpu.pipeline_mode<synchronous>, transform_indices = @transform_2, window_bounds = array<i64: 1, 64>}, {transform_indices = @transform_3, window_bounds = array<i64: 1024, 64>}]} {
    %c0 = arith.constant 0 : index
    %c0_0 = arith.constant 0 : index
    %0 = vector.load %arg1[%c0, %c0_0] : memref<1024x147xbf16, #tpu.memory_space<vmem>>, vector<128x147xbf16>
    %c0_1 = arith.constant 0 : index
    %c0_2 = arith.constant 0 : index
    %1 = vector.load %arg2[%c0_1, %c0_2] : memref<147x64xbf16, #tpu.memory_space<vmem>>, vector<147x64xbf16>
    %cst = arith.constant dense<0.000000e+00> : vector<128x64xf32>
    %2 = tpu.matmul %0, %1, %cst {dimension_numbers = #tpu.dot_dimension_numbers<[1], [0], [0], [1], [0, 0, 1, 1], [], []>} : vector<128x147xbf16>, vector<147x64xbf16>, vector<128x64xf32> -> vector<128x64xf32>
    %c0_3 = arith.constant 0 : index
    %c0_4 = arith.constant 0 : index
    %3 = vector.load %arg3[%c0_3, %c0_4] : memref<1x64xf32, #tpu.memory_space<vmem>>, vector<1x64xf32>
    %4 = vector.broadcast %3 : vector<1x64xf32> to vector<128x64xf32>
    %5 = arith.addf %2, %4 : vector<128x64xf32>
    %6 = arith.truncf %5 : vector<128x64xf32> to vector<128x64xbf16>
    %c0_5 = arith.constant 0 : index
    %c0_6 = arith.constant 0 : index
    %7 = vector.load %arg4[%c0_5, %c0_6] : memref<1024x64xbf16, #tpu.memory_space<vmem>>, vector<128x64xbf16>
    tpu.vector_store %arg4[%c0_5, %c0_6], %6 {strides = array<i32>} : memref<1024x64xbf16, #tpu.memory_space<vmem>>, vector<128x64xbf16>,
    %c128 = arith.constant 128 : index
    %c0_7 = arith.constant 0 : index
    %8 = vector.load %arg1[%c128, %c0_7] : memref<1024x147xbf16, #tpu.memory_space<vmem>>, vector<128x147xbf16>
    %c0_8 = arith.constant 0 : index
    %c0_9 = arith.constant 0 : index
    %9 = vector.load %arg2[%c0_8, %c0_9] : memref<147x64xbf16, #tpu.memory_space<vmem>>, vector<147x64xbf16>
    %cst_10 = arith.constant dense<0.000000e+00> : vector<128x64xf32>
    %10 = tpu.matmul %8, %9, %cst_10 {dimension_numbers = #tpu.dot_dimension_numbers<[1], [0], [0], [1], [0, 0, 1, 1], [], []>} : vector<128x147xbf16>, vector<147x64xbf16>, vector<128x64xf32> -> vector<128x64xf32>
    %c0_11 = arith.constant 0 : index
    %c0_12 = arith.constant 0 : index
    %11 = vector.load %arg3[%c0_11, %c0_12] : memref<1x64xf32, #tpu.memory_space<vmem>>, vector<1x64xf32>
    %12 = vector.broadcast %11 : vector<1x64xf32> to vector<128x64xf32>
    %13 = arith.addf %10, %12 : vector<128x64xf32>
    %14 = arith.truncf %13 : vector<128x64xf32> to vector<128x64xbf16>
    %c128_13 = arith.constant 128 : index
    %c0_14 = arith.constant 0 : index
    %15 = vector.load %arg4[%c128_13, %c0_14] : memref<1024x64xbf16, #tpu.memory_space<vmem>>, vector<128x64xbf16>
    tpu.vector_store %arg4[%c128_13, %c0_14], %14 {strides = array<i32>} : memref<1024x64xbf16, #tpu.memory_space<vmem>>, vector<128x64xbf16>,
    %c256 = arith.constant 256 : index
    %c0_15 = arith.constant 0 : index
    %16 = vector.load %arg1[%c256, %c0_15] : memref<1024x147xbf16, #tpu.memory_space<vmem>>, vector<128x147xbf16>
    %c0_16 = arith.constant 0 : index
    %c0_17 = arith.constant 0 : index
    %17 = vector.load %arg2[%c0_16, %c0_17] : memref<147x64xbf16, #tpu.memory_space<vmem>>, vector<147x64xbf16>
    %cst_18 = arith.constant dense<0.000000e+00> : vector<128x64xf32>
    %18 = tpu.matmul %16, %17, %cst_18 {dimension_numbers = #tpu.dot_dimension_numbers<[1], [0], [0], [1], [0, 0, 1, 1], [], []>} : vector<128x147xbf16>, vector<147x64xbf16>, vector<128x64xf32> -> vector<128x64xf32>
    %c0_19 = arith.constant 0 : index
    %c0_20 = arith.constant 0 : index
    %19 = vector.load %arg3[%c0_19, %c0_20] : memref<1x64xf32, #tpu.memory_space<vmem>>, vector<1x64xf32>
    %20 = vector.broadcast %19 : vector<1x64xf32> to vector<128x64xf32>
    %21 = arith.addf %18, %20 : vector<128x64xf32>
    %22 = arith.truncf %21 : vector<128x64xf32> to vector<128x64xbf16>
    %c256_21 = arith.constant 256 : index
    %c0_22 = arith.constant 0 : index
    %23 = vector.load %arg4[%c256_21, %c0_22] : memref<1024x64xbf16, #tpu.memory_space<vmem>>, vector<128x64xbf16>
    tpu.vector_store %arg4[%c256_21, %c0_22], %22 {strides = array<i32>} : memref<1024x64xbf16, #tpu.memory_space<vmem>>, vector<128x64xbf16>,
    %c384 = arith.constant 384 : index
    %c0_23 = arith.constant 0 : index
    %24 = vector.load %arg1[%c384, %c0_23] : memref<1024x147xbf16, #tpu.memory_space<vmem>>, vector<128x147xbf16>
    %c0_24 = arith.constant 0 : index
    %c0_25 = arith.constant 0 : index
    %25 = vector.load %arg2[%c0_24, %c0_25] : memref<147x64xbf16, #tpu.memory_space<vmem>>, vector<147x64xbf16>
    %cst_26 = arith.constant dense<0.000000e+00> : vector<128x64xf32>
    %26 = tpu.matmul %24, %25, %cst_26 {dimension_numbers = #tpu.dot_dimension_numbers<[1], [0], [0], [1], [0, 0, 1, 1], [], []>} : vector<128x147xbf16>, vector<147x64xbf16>, vector<128x64xf32> -> vector<128x64xf32>
    %c0_27 = arith.constant 0 : index
    %c0_28 = arith.constant 0 : index
    %27 = vector.load %arg3[%c0_27, %c0_28] : memref<1x64xf32, #tpu.memory_space<vmem>>, vector<1x64xf32>
    %28 = vector.broadcast %27 : vector<1x64xf32> to vector<128x64xf32>
    %29 = arith.addf %26, %28 : vector<128x64xf32>
    %30 = arith.truncf %29 : vector<128x64xf32> to vector<128x64xbf16>
    %c384_29 = arith.constant 384 : index
    %c0_30 = arith.constant 0 : index
    %31 = vector.load %arg4[%c384_29, %c0_30] : memref<1024x64xbf16, #tpu.memory_space<vmem>>, vector<128x64xbf16>
    tpu.vector_store %arg4[%c384_29, %c0_30], %30 {strides = array<i32>} : memref<1024x64xbf16, #tpu.memory_space<vmem>>, vector<128x64xbf16>,
    %c512 = arith.constant 512 : index
    %c0_31 = arith.constant 0 : index
    %32 = vector.load %arg1[%c512, %c0_31] : memref<1024x147xbf16, #tpu.memory_space<vmem>>, vector<128x147xbf16>
    %c0_32 = arith.constant 0 : index
    %c0_33 = arith.constant 0 : index
    %33 = vector.load %arg2[%c0_32, %c0_33] : memref<147x64xbf16, #tpu.memory_space<vmem>>, vector<147x64xbf16>
    %cst_34 = arith.constant dense<0.000000e+00> : vector<128x64xf32>
    %34 = tpu.matmul %32, %33, %cst_34 {dimension_numbers = #tpu.dot_dimension_numbers<[1], [0], [0], [1], [0, 0, 1, 1], [], []>} : vector<128x147xbf16>, vector<147x64xbf16>, vector<128x64xf32> -> vector<128x64xf32>
    %c0_35 = arith.constant 0 : index
    %c0_36 = arith.constant 0 : index
    %35 = vector.load %arg3[%c0_35, %c0_36] : memref<1x64xf32, #tpu.memory_space<vmem>>, vector<1x64xf32>
    %36 = vector.broadcast %35 : vector<1x64xf32> to vector<128x64xf32>
    %37 = arith.addf %34, %36 : vector<128x64xf32>
    %38 = arith.truncf %37 : vector<128x64xf32> to vector<128x64xbf16>
    %c512_37 = arith.constant 512 : index
    %c0_38 = arith.constant 0 : index
    %39 = vector.load %arg4[%c512_37, %c0_38] : memref<1024x64xbf16, #tpu.memory_space<vmem>>, vector<128x64xbf16>
    tpu.vector_store %arg4[%c512_37, %c0_38], %38 {strides = array<i32>} : memref<1024x64xbf16, #tpu.memory_space<vmem>>, vector<128x64xbf16>,
    %c640 = arith.constant 640 : index
    %c0_39 = arith.constant 0 : index
    %40 = vector.load %arg1[%c640, %c0_39] : memref<1024x147xbf16, #tpu.memory_space<vmem>>, vector<128x147xbf16>
    %c0_40 = arith.constant 0 : index
    %c0_41 = arith.constant 0 : index
    %41 = vector.load %arg2[%c0_40, %c0_41] : memref<147x64xbf16, #tpu.memory_space<vmem>>, vector<147x64xbf16>
    %cst_42 = arith.constant dense<0.000000e+00> : vector<128x64xf32>
    %42 = tpu.matmul %40, %41, %cst_42 {dimension_numbers = #tpu.dot_dimension_numbers<[1], [0], [0], [1], [0, 0, 1, 1], [], []>} : vector<128x147xbf16>, vector<147x64xbf16>, vector<128x64xf32> -> vector<128x64xf32>
    %c0_43 = arith.constant 0 : index
    %c0_44 = arith.constant 0 : index
    %43 = vector.load %arg3[%c0_43, %c0_44] : memref<1x64xf32, #tpu.memory_space<vmem>>, vector<1x64xf32>
    %44 = vector.broadcast %43 : vector<1x64xf32> to vector<128x64xf32>
    %45 = arith.addf %42, %44 : vector<128x64xf32>
    %46 = arith.truncf %45 : vector<128x64xf32> to vector<128x64xbf16>
    %c640_45 = arith.constant 640 : index
    %c0_46 = arith.constant 0 : index
    %47 = vector.load %arg4[%c640_45, %c0_46] : memref<1024x64xbf16, #tpu.memory_space<vmem>>, vector<128x64xbf16>
    tpu.vector_store %arg4[%c640_45, %c0_46], %46 {strides = array<i32>} : memref<1024x64xbf16, #tpu.memory_space<vmem>>, vector<128x64xbf16>,
    %c768 = arith.constant 768 : index
    %c0_47 = arith.constant 0 : index
    %48 = vector.load %arg1[%c768, %c0_47] : memref<1024x147xbf16, #tpu.memory_space<vmem>>, vector<128x147xbf16>
    %c0_48 = arith.constant 0 : index
    %c0_49 = arith.constant 0 : index
    %49 = vector.load %arg2[%c0_48, %c0_49] : memref<147x64xbf16, #tpu.memory_space<vmem>>, vector<147x64xbf16>
    %cst_50 = arith.constant dense<0.000000e+00> : vector<128x64xf32>
    %50 = tpu.matmul %48, %49, %cst_50 {dimension_numbers = #tpu.dot_dimension_numbers<[1], [0], [0], [1], [0, 0, 1, 1], [], []>} : vector<128x147xbf16>, vector<147x64xbf16>, vector<128x64xf32> -> vector<128x64xf32>
    %c0_51 = arith.constant 0 : index
    %c0_52 = arith.constant 0 : index
    %51 = vector.load %arg3[%c0_51, %c0_52] : memref<1x64xf32, #tpu.memory_space<vmem>>, vector<1x64xf32>
    %52 = vector.broadcast %51 : vector<1x64xf32> to vector<128x64xf32>
    %53 = arith.addf %50, %52 : vector<128x64xf32>
    %54 = arith.truncf %53 : vector<128x64xf32> to vector<128x64xbf16>
    %c768_53 = arith.constant 768 : index
    %c0_54 = arith.constant 0 : index
    %55 = vector.load %arg4[%c768_53, %c0_54] : memref<1024x64xbf16, #tpu.memory_space<vmem>>, vector<128x64xbf16>
    tpu.vector_store %arg4[%c768_53, %c0_54], %54 {strides = array<i32>} : memref<1024x64xbf16, #tpu.memory_space<vmem>>, vector<128x64xbf16>,
    %c896 = arith.constant 896 : index
    %c0_55 = arith.constant 0 : index
    %56 = vector.load %arg1[%c896, %c0_55] : memref<1024x147xbf16, #tpu.memory_space<vmem>>, vector<128x147xbf16>
    %c0_56 = arith.constant 0 : index
    %c0_57 = arith.constant 0 : index
    %57 = vector.load %arg2[%c0_56, %c0_57] : memref<147x64xbf16, #tpu.memory_space<vmem>>, vector<147x64xbf16>
    %cst_58 = arith.constant dense<0.000000e+00> : vector<128x64xf32>
    %58 = tpu.matmul %56, %57, %cst_58 {dimension_numbers = #tpu.dot_dimension_numbers<[1], [0], [0], [1], [0, 0, 1, 1], [], []>} : vector<128x147xbf16>, vector<147x64xbf16>, vector<128x64xf32> -> vector<128x64xf32>
    %c0_59 = arith.constant 0 : index
    %c0_60 = arith.constant 0 : index
    %59 = vector.load %arg3[%c0_59, %c0_60] : memref<1x64xf32, #tpu.memory_space<vmem>>, vector<1x64xf32>
    %60 = vector.broadcast %59 : vector<1x64xf32> to vector<128x64xf32>
    %61 = arith.addf %58, %60 : vector<128x64xf32>
    %62 = arith.truncf %61 : vector<128x64xf32> to vector<128x64xbf16>
    %c896_61 = arith.constant 896 : index
    %c0_62 = arith.constant 0 : index
    %63 = vector.load %arg4[%c896_61, %c0_62] : memref<1024x64xbf16, #tpu.memory_space<vmem>>, vector<128x64xbf16>
    tpu.vector_store %arg4[%c896_61, %c0_62], %62 {strides = array<i32>} : memref<1024x64xbf16, #tpu.memory_space<vmem>>, vector<128x64xbf16>,
    return
  }
  func.func @transform_0(%arg0: i32) -> (i32, i32) {
    %c0_i32 = arith.constant 0 : i32
    %c0_i32_0 = arith.constant 0 : i32
    return %arg0, %c0_i32 : i32, i32
  }
  func.func @transform_1(%arg0: i32) -> (i32, i32) {
    %c0_i32 = arith.constant 0 : i32
    %c0_i32_0 = arith.constant 0 : i32
    %c0_i32_1 = arith.constant 0 : i32
    return %c0_i32, %c0_i32_0 : i32, i32
  }
  func.func @transform_2(%arg0: i32) -> (i32, i32) {
    %c0_i32 = arith.constant 0 : i32
    %c0_i32_0 = arith.constant 0 : i32
    %c0_i32_1 = arith.constant 0 : i32
    return %c0_i32, %c0_i32_0 : i32, i32
  }
  func.func @transform_3(%arg0: i32) -> (i32, i32) {
    %c0_i32 = arith.constant 0 : i32
    %c0_i32_0 = arith.constant 0 : i32
    return %arg0, %c0_i32 : i32, i32
  }
}

</mosaic_0001>

<llo_original>
// kernel: conv_im2col.1
$region0: #{conv_im2col.1}
  #allocation0 [shape = 'u32[]', space=smem, size = 0x4, offset = 0x4, fixed_abs, tag = 'smem constant byte address 0x4 - core index']
  #allocation1 [shape = 'u32[72,128]{1,0:T(1,128)}', space=vmem, size = 0x9000, scoped, tag = 'internal scratch']
  %s0 = inlined_call_operand.vmem [shape: bf16[8192,147], index: 0, kind: input, shape index: {}]
  %s1 = inlined_call_operand.vmem [shape: bf16[147,64], index: 1, kind: input, shape index: {}]
  %s2 = inlined_call_operand.vmem [shape: f32[1,64], index: 2, kind: input, shape index: {}]
  %s3 = inlined_call_operand.hbm [shape: bf16[8192,64], index: 3, kind: output, shape index: {}]
  %s4 = sld [smem:[#allocation0]]
  $region45: #{conv_im2col.1} parent=0
    _
  %s6 = ssub.s32 1, %s4
  %s7 = scalar_select 0, %s6, %s4
  $region1: #{conv_im2col.1} parent=0
    #allocation2 [shape = 'u8[524288]{0}', space=vmem, size = 0x80000, scoped, tag = 'output window, operand 0']
    #allocation3 [shape = 's32[2]{0}', space=sflag, size = 0x8, scoped, tag = 'scoped memory for conv_im2col.1']
    %8 = vsyncpa [#allocation3], 0
    %s9 = scalar_lea.sflag [#allocation3], 1
    %10 = vsyncpa %s9, 0
    loop: start=0, step=1, limit=10
    $region2: #{conv_im2col.1} parent=1 // loop_pre_header
      _
    $region3: #{conv_im2col.1} parent=1 // loop_header
      %s12 = sphi 0, %s16
      %p13 = scmp.ge.s32.totalorder %s12, 10
      %s22 = sphi 0, %s24
      %s25 = sphi 0, %s22
      %s26 = sphi 0, %s25
      %s42 = sphi 0, %s26
      %s46 = sphi 0, %s46
      %s48 = sphi 0, %s46
      %s49 = sphi 0, %s48
      %s63 = sphi 0, %s49
      %s67 = sphi 0, %s67
      %s69 = sphi 0, %s67
      %s70 = sphi 0, %s69
      %s84 = sphi 0, %s70
      %s90 = sphi 0, %s92
      %s93 = sphi 0, %s90
      %s94 = sphi 0, %s93
      %s110 = sphi 0, %s94
    $region4: #{conv_im2col.1} parent=1 // loop_header_branch
      %15 = sbr.rel (%p13) target = $region8
    $region5: #{conv_im2col.1} parent=1 // loop_body
      %s17 = ssub.s32 %s12, 1
      %s18 = ssub.s32 %s12, 2
      %s19 = sadd.s32 %s12, 1
      %s20 = ssub.s32 %s12, %s19
      %p21 = scmp.eq.s32.totalorder %s20, 0
      %s23 = sadd.s32 %s22, 1
      %s24 = scalar_select %p21, %s22, %s23
      %p27 = pneg %p21
      %p28 = scmp.eq.s32.totalorder %s12, 7
      %p29 = por %p27, %p28
      %p30 = scmp.ne.s32.totalorder %s22, %s25
      %p31 = scmp.eq.s32.totalorder %s12, 0
      %p32 = por %p30, %p31
      %p33 = scmp.ne.s32.totalorder %s22, %s25
      %p34 = scmp.eq.s32.totalorder %s17, 7
      %p35 = por %p33, %p34
      %p36 = scmp.ne.s32.totalorder %s25, %s26
      %p37 = scmp.eq.s32.totalorder %s17, 0
      %p38 = por %p36, %p37
      %p39 = scmp.ne.s32.totalorder %s25, %s26
      %p40 = scmp.eq.s32.totalorder %s18, 7
      %p41 = por %p39, %p40
      %p43 = scmp.ne.s32.totalorder %s26, %s42
      %p44 = scmp.eq.s32.totalorder %s18, 0
      %p45 = por %p43, %p44
      %s47 = sadd.s32 %s46, 1
      %p50 = scmp.eq.s32.totalorder %s12, 7
      %p51 = scmp.ne.s32.totalorder %s46, %s48
      %p52 = scmp.eq.s32.totalorder %s12, 0
      %p53 = por %p51, %p52
      %p54 = scmp.ne.s32.totalorder %s46, %s48
      %p55 = scmp.eq.s32.totalorder %s17, 7
      %p56 = por %p54, %p55
      %p57 = scmp.ne.s32.totalorder %s48, %s49
      %p58 = scmp.eq.s32.totalorder %s17, 0
      %p59 = por %p57, %p58
      %p60 = scmp.ne.s32.totalorder %s48, %s49
      %p61 = scmp.eq.s32.totalorder %s18, 7
      %p62 = por %p60, %p61
      %p64 = scmp.ne.s32.totalorder %s49, %s63
      %p65 = scmp.eq.s32.totalorder %s18, 0
      %p66 = por %p64, %p65
      %s68 = sadd.s32 %s67, 1
      %p71 = scmp.eq.s32.totalorder %s12, 7
      %p72 = scmp.ne.s32.totalorder %s67, %s69
      %p73 = scmp.eq.s32.totalorder %s12, 0
      %p74 = por %p72, %p73
      %p75 = scmp.ne.s32.totalorder %s67, %s69
      %p76 = scmp.eq.s32.totalorder %s17, 7
      %p77 = por %p75, %p76
      %p78 = scmp.ne.s32.totalorder %s69, %s70
      %p79 = scmp.eq.s32.totalorder %s17, 0
      %p80 = por %p78, %p79
      %p81 = scmp.ne.s32.totalorder %s69, %s70
      %p82 = scmp.eq.s32.totalorder %s18, 7
      %p83 = por %p81, %p82
      %p85 = scmp.ne.s32.totalorder %s70, %s84
      %p86 = scmp.eq.s32.totalorder %s18, 0
      %p87 = por %p85, %p86
      %s88 = ssub.s32 %s12, %s19
      %p89 = scmp.eq.s32.totalorder %s88, 0
      %s91 = sadd.s32 %s90, 1
      %s92 = scalar_select %p89, %s90, %s91
      %p95 = pneg %p89
      %p96 = scmp.eq.s32.totalorder %s12, 7
      %p97 = por %p95, %p96
      %p98 = scmp.ne.s32.totalorder %s90, %s93
      %p99 = scmp.eq.s32.totalorder %s12, 0
      %p100 = por %p98, %p99
      %p101 = scmp.ne.s32.totalorder %s90, %s93
      %p102 = scmp.eq.s32.totalorder %s17, 7
      %p103 = por %p101, %p102
      %p104 = scmp.ne.s32.totalorder %s93, %s94
      %p105 = scmp.eq.s32.totalorder %s17, 0
      %p106 = por %p104, %p105
      %p107 = scmp.ne.s32.totalorder %s93, %s94
      %p108 = scmp.eq.s32.totalorder %s18, 7
      %p109 = por %p107, %p108
      %p111 = scmp.ne.s32.totalorder %s94, %s110
      %p112 = scmp.eq.s32.totalorder %s18, 0
      %p113 = por %p111, %p112
      %p114 = scmp.le.s32.totalorder 1, %s12
      %p115 = scmp.lt.s32.totalorder %s12, 9
      %p116 = pnand %p114, %p115
      %p117 = pneg %p116
      // Predicated region
      $region9: #{conv_im2col.1} parent=5 // pred_check
        _
      $region10: #{conv_im2col.1} parent=5 // pred_check_branch
        %119 = sbr.rel (%p116) target = $region12
      $region11: #{conv_im2col.1} parent=5 // pred_region
        %s120 = ssub.s32 %s12, 1
        // Predicated region
        $region13: #{conv_im2col.1} parent=11 // pred_check
          %p121 = pneg %p59
        $region14: #{conv_im2col.1} parent=11 // pred_check_branch
          %123 = sbr.rel (%p121) target = $region16
        $region15: #{conv_im2col.1} parent=11 // pred_region
          _
        $region16: #{conv_im2col.1} parent=11 // pred_fallthru
          _
        // Predicated region
        $region17: #{conv_im2col.1} parent=11 // pred_check
          %p124 = pneg %p80
        $region18: #{conv_im2col.1} parent=11 // pred_check_branch
          %126 = sbr.rel (%p124) target = $region20
        $region19: #{conv_im2col.1} parent=11 // pred_region
          _
        $region20: #{conv_im2col.1} parent=11 // pred_fallthru
          _
      $region12: #{conv_im2col.1} parent=5 // pred_fallthru
        _
      %p127 = scmp.lt.s32.totalorder %s12, 8
      // Predicated region
      $region21: #{conv_im2col.1} parent=5 // pred_check
        %p128 = pneg %p127
      $region22: #{conv_im2col.1} parent=5 // pred_check_branch
        %130 = sbr.rel (%p128) target = $region24
      $region23: #{conv_im2col.1} parent=5 // pred_region
        // Predicated region
        $region25: #{conv_im2col.1} parent=23 // pred_check
          %p131 = pneg %p32
        $region26: #{conv_im2col.1} parent=23 // pred_check_branch
          %133 = sbr.rel (%p131) target = $region28
        $region27: #{conv_im2col.1} parent=23 // pred_region
          %s134 = smul.u32 128, %s12
          %p135 = scmp.lt.s32.totalorder %s134, 1023
          %s136 = scalar_select %p135, %s134, 1023
          %s137 = smul.addr %s136, 2
          %s138 = smul.addr %s137, 4
          %s139 = scalar_lea.vmem %s0, %s138
          %s140 = smul.u32 128, %s12
        $region28: #{conv_im2col.1} parent=23 // pred_fallthru
          _
      $region24: #{conv_im2col.1} parent=5 // pred_fallthru
        _
      %p141 = scmp.le.s32.totalorder 1, %s12
      %p142 = scmp.lt.s32.totalorder %s12, 9
      %p143 = pnand %p141, %p142
      %p144 = pneg %p143
      // Predicated region
      $region29: #{conv_im2col.1} parent=5 // pred_check
        _
      $region30: #{conv_im2col.1} parent=5 // pred_check_branch
        %146 = sbr.rel (%p143) target = $region32
      $region31: #{conv_im2col.1} parent=5 // pred_region
        %s147 = ssub.s32 %s12, 1
        %s148 = smul.u32 128, %s17
        %p149 = scmp.lt.s32.totalorder %s148, 1023
        %s150 = scalar_select %p149, %s148, 1023
        %s151 = smul.addr %s150, 2
        %s152 = smul.addr %s151, 4
        %s153 = scalar_lea.vmem %s0, %s152
        %p154 = pneg %p38
        %p155 = pneg %p35
        %p156 = pneg %p59
        %p157 = pneg %p56
        %p158 = pneg %p80
        %p159 = pneg %p77
        %p160 = pneg %p106
        %p161 = pneg %p103
        %s162 = sand.u32 %s93, 1
        %s163 = scalar_lea.sflag [#allocation3], %s162
        %s164 = sand.u32 %s93, 1
        %s165 = smul.addr %s164, 512
        %s166 = scalar_lea.vmem [#allocation2], %s165
        %s167 = smul.u32 128, %s17
        %p168 = scmp.lt.s32.totalorder %s167, 1023
        %s169 = scalar_select %p168, %s167, 1023
        %s170 = smul.addr %s169, 2
        %s171 = smul.addr %s170, 4
        %s172 = scalar_lea.vmem %s0, %s171
        %s173 = smul.u32 128, %s17
        %s174 = smul.u32 128, %s17
        %v176 = vld [vmem:[%s172] sm:$0xff]
        %v177 = vld [vmem:[%s172 + $0x8] sm:$0xff]
        %v178 = vld [vmem:[%s172 + $0x10] sm:$0xff]
        %v179 = vld [vmem:[%s172 + $0x18] sm:$0xff]
        %v180 = vld [vmem:[%s172 + $0x20] sm:$0xff]
        %v181 = vld [vmem:[%s172 + $0x28] sm:$0xff]
        %v182 = vld [vmem:[%s172 + $0x30] sm:$0xff]
        %v183 = vld [vmem:[%s172 + $0x38] sm:$0xff]
        %v184 = vld [vmem:[%s172 + $0x40] sm:$0xff]
        %v185 = vld [vmem:[%s172 + $0x48] sm:$0xff]
        %v186 = vld [vmem:[%s172 + $0x50] sm:$0xff]
        %v187 = vld [vmem:[%s172 + $0x58] sm:$0xff]
        %v188 = vld [vmem:[%s172 + $0x60] sm:$0xff]
        %v189 = vld [vmem:[%s172 + $0x68] sm:$0xff]
        %v190 = vld [vmem:[%s172 + $0x70] sm:$0xff]
        %v191 = vld [vmem:[%s172 + $0x78] sm:$0xff]
        %v192 = vld [vmem:[%s1] sm:$0xf]
        %v193 = vld [vmem:[%s1 + $0x4] sm:$0xf]
        %v194 = vld [vmem:[%s1 + $0x8] sm:$0xf]
        %v195 = vld [vmem:[%s1 + $0xc] sm:$0xf]
        %v196 = vld [vmem:[%s1 + $0x10] sm:$0xf]
        %v197 = vld [vmem:[%s1 + $0x14] sm:$0xf]
        %v198 = vld [vmem:[%s1 + $0x18] sm:$0xf]
        %v199 = vld [vmem:[%s1 + $0x1c] sm:$0xf]
        %v200 = vld [vmem:[%s1 + $0x20] sm:$0xf]
        %v201 = vld [vmem:[%s1 + $0x24] sm:$0xf]
        %v202 = vld [vmem:[%s1 + $0x28] sm:$0xf]
        %v203 = vld [vmem:[%s1 + $0x2c] sm:$0xf]
        %v204 = vld [vmem:[%s1 + $0x30] sm:$0xf]
        %v205 = vld [vmem:[%s1 + $0x34] sm:$0xf]
        %v206 = vld [vmem:[%s1 + $0x38] sm:$0xf]
        %v207 = vld [vmem:[%s1 + $0x3c] sm:$0xf]
        %v208 = vld [vmem:[%s1 + $0x40] sm:$0xf]
        %v209 = vld [vmem:[%s1 + $0x44] sm:$0xf]
        %v210 = vld [vmem:[%s1 + $0x48] sm:$0x3]
        %v211 = vld [vmem:[%s2] sm:$0x1]
        %v213 = vperm.slane %v211, 0
        %v231 = vunpack.c.l.b16 %v176
        %v232 = vunpack.c.h.b16 %v176
        %v233 = vunpack.c.l.b16 %v177
        %v234 = vunpack.c.h.b16 %v177
        %v235 = vunpack.c.l.b16 %v178
        %v236 = vunpack.c.h.b16 %v178
        %v237 = vunpack.c.l.b16 %v179
        %v238 = vunpack.c.h.b16 %v179
        %v239 = vunpack.c.l.b16 %v180
        %v240 = vunpack.c.h.b16 %v180
        %v241 = vunpack.c.l.b16 %v181
        %v242 = vunpack.c.h.b16 %v181
        %v243 = vunpack.c.l.b16 %v182
        %v244 = vunpack.c.h.b16 %v182
        %v245 = vunpack.c.l.b16 %v183
        %v246 = vunpack.c.h.b16 %v183
        %v247 = vunpack.c.l.b16 %v184
        %v248 = vunpack.c.h.b16 %v184
        %v249 = vunpack.c.l.b16 %v185
        %v250 = vunpack.c.h.b16 %v185
        %v251 = vunpack.c.l.b16 %v186
        %v252 = vunpack.c.h.b16 %v186
        %v253 = vunpack.c.l.b16 %v187
        %v254 = vunpack.c.h.b16 %v187
        %v255 = vunpack.c.l.b16 %v188
        %v256 = vunpack.c.h.b16 %v188
        %v257 = vunpack.c.l.b16 %v189
        %v258 = vunpack.c.h.b16 %v189
        %v259 = vunpack.c.l.b16 %v190
        %v260 = vunpack.c.h.b16 %v190
        %v261 = vunpack.c.l.b16 %v191
        %v262 = vunpack.c.h.b16 %v191
        %v263 = vpack.c.b16 %v233, %v231
        %v264 = vpack.c.b16 %v234, %v232
        %v265 = vpack.c.b16 %v237, %v235
        %v266 = vpack.c.b16 %v238, %v236
        %v267 = vpack.c.b16 %v241, %v239
        %v268 = vpack.c.b16 %v242, %v240
        %v269 = vpack.c.b16 %v245, %v243
        %v270 = vpack.c.b16 %v246, %v244
        %v271 = vpack.c.b16 %v249, %v247
        %v272 = vpack.c.b16 %v250, %v248
        %v273 = vpack.c.b16 %v253, %v251
        %v274 = vpack.c.b16 %v254, %v252
        %v275 = vpack.c.b16 %v257, %v255
        %v276 = vpack.c.b16 %v258, %v256
        %v277 = vpack.c.b16 %v261, %v259
        %v278 = vpack.c.b16 %v262, %v260
        %v306 = vunpack.c.l.b16 %v192
        %v307 = vunpack.c.l.b16 %v193
        %v308 = vunpack.c.l.b16 %v194
        %v309 = vunpack.c.l.b16 %v195
        %v310 = vunpack.c.l.b16 %v196
        %v311 = vunpack.c.l.b16 %v197
        %v312 = vunpack.c.l.b16 %v198
        %v313 = vunpack.c.l.b16 %v199
        %v314 = vunpack.c.l.b16 %v200
        %v315 = vunpack.c.l.b16 %v201
        %v316 = vunpack.c.l.b16 %v202
        %v317 = vunpack.c.l.b16 %v203
        %v318 = vunpack.c.l.b16 %v204
        %v319 = vunpack.c.l.b16 %v205
        %v320 = vunpack.c.l.b16 %v206
        %v321 = vunpack.c.l.b16 %v207
        %v322 = vunpack.c.l.b16 %v208
        %v323 = vunpack.c.l.b16 %v209
        %v324 = vunpack.c.l.b16 %v210
        %v325 = vpack.c.b16 %v307, %v306
        %v326 = vpack.c.b16 %v309, %v308
        %v327 = vpack.c.b16 %v311, %v310
        %v328 = vpack.c.b16 %v313, %v312
        %v329 = vpack.c.b16 %v315, %v314
        %v330 = vpack.c.b16 %v317, %v316
        %v331 = vpack.c.b16 %v319, %v318
        %v332 = vpack.c.b16 %v321, %v320
        %v333 = vpack.c.b16 %v323, %v322
        %v334 = vpack.c.b16 %v324, %v324
        %vm344 = vcmask 154624
        %v346 = vsel %vm344, %v264, 0
        %v349 = vsel %vm344, %v266, 0
        %v352 = vsel %vm344, %v268, 0
        %v355 = vsel %vm344, %v270, 0
        %v358 = vsel %vm344, %v272, 0
        %v361 = vsel %vm344, %v274, 0
        %v364 = vsel %vm344, %v276, 0
        %v367 = vsel %vm344, %v278, 0
        %vm369 = vcmask 1040384
        %vm370 = vcmask 1041408
        %v371 = vsel %vm369, 4294967295, 65535
        %v372 = vsel %vm370, %v371, 0
        %v374 = vand.u32 %v334, %v372
        %376 = vmatpush.bf16.msra.mxu0 %v332
        %377 = vmatpush.bf16.msra.mxu0 %v331
        %378 = vmatpush.bf16.msra.mxu0 %v330
        %379 = vmatpush.bf16.msra.mxu0 %v329
        %380 = vmatpush.bf16.msra.mxu0 %v328
        %381 = vmatpush.bf16.msra.mxu0 %v327
        %382 = vmatpush.bf16.msra.mxu0 %v326
        %383 = vmatpush.bf16.msra.mxu0 %v325
        %384 = vmatmul.bf16.gmra.mxu0 %v263
        %v385 = vpop.f32.mrf.mxu0
        %v386 = vadd.f32 %v213, %v385
        %v387 = vpop.f32.mrf.mxu0
        %v388 = vadd.f32 %v213, %v387
        %389 = vmatmul.bf16.gmra.mxu0 %v265
        %v390 = vpop.f32.mrf.mxu0
        %v391 = vadd.f32 %v213, %v390
        %v392 = vpop.f32.mrf.mxu0
        %v393 = vadd.f32 %v213, %v392
        %394 = vmatmul.bf16.gmra.mxu0 %v267
        %v395 = vpop.f32.mrf.mxu0
        %v396 = vadd.f32 %v213, %v395
        %v397 = vpop.f32.mrf.mxu0
        %v398 = vadd.f32 %v213, %v397
        %399 = vmatmul.bf16.gmra.mxu0 %v269
        %v400 = vpop.f32.mrf.mxu0
        %v401 = vadd.f32 %v213, %v400
        %v402 = vpop.f32.mrf.mxu0
        %v403 = vadd.f32 %v213, %v402
        %404 = vmatmul.bf16.gmra.mxu0 %v271
        %v405 = vpop.f32.mrf.mxu0
        %v406 = vadd.f32 %v213, %v405
        %v407 = vpop.f32.mrf.mxu0
        %v408 = vadd.f32 %v213, %v407
        %409 = vmatmul.bf16.gmra.mxu0 %v273
        %v410 = vpop.f32.mrf.mxu0
        %v411 = vadd.f32 %v213, %v410
        %v412 = vpop.f32.mrf.mxu0
        %v413 = vadd.f32 %v213, %v412
        %414 = vmatmul.bf16.gmra.mxu0 %v275
        %v415 = vpop.f32.mrf.mxu0
        %v416 = vadd.f32 %v213, %v415
        %v417 = vpop.f32.mrf.mxu0
        %v418 = vadd.f32 %v213, %v417
        %419 = vmatmul.bf16.gmra.mxu0 %v277
        %v420 = vpop.f32.mrf.mxu0
        %v421 = vadd.f32 %v213, %v420
        %v422 = vpop.f32.mrf.mxu0
        %v423 = vadd.f32 %v213, %v422
        %424 = vdwg.mxu0
        %425 = vmatpush.bf16.msra.mxu0 0
        %426 = vmatpush.bf16.msra.mxu0 0
        %427 = vmatpush.bf16.msra.mxu0 0
        %428 = vmatpush.bf16.msra.mxu0 0
        %429 = vmatpush.bf16.msra.mxu0 0
        %430 = vmatpush.bf16.msra.mxu0 0
        %431 = vmatpush.bf16.msra.mxu0 %v374
        %432 = vmatpush.bf16.msra.mxu0 %v333
        %433 = vmatmul.bf16.gmra.mxu0 %v346
        %v434 = vpop.f32.mrf.mxu0
        %v435 = vadd.f32 %v386, %v434
        %v436 = vpop.f32.mrf.mxu0
        %v437 = vadd.f32 %v388, %v436
        %438 = vmatmul.bf16.gmra.mxu0 %v349
        %v439 = vpop.f32.mrf.mxu0
        %v440 = vadd.f32 %v391, %v439
        %v441 = vpop.f32.mrf.mxu0
        %v442 = vadd.f32 %v393, %v441
        %443 = vmatmul.bf16.gmra.mxu0 %v352
        %v444 = vpop.f32.mrf.mxu0
        %v445 = vadd.f32 %v396, %v444
        %v446 = vpop.f32.mrf.mxu0
        %v447 = vadd.f32 %v398, %v446
        %448 = vmatmul.bf16.gmra.mxu0 %v355
        %v449 = vpop.f32.mrf.mxu0
        %v450 = vadd.f32 %v401, %v449
        %v451 = vpop.f32.mrf.mxu0
        %v452 = vadd.f32 %v403, %v451
        %453 = vmatmul.bf16.gmra.mxu0 %v358
        %v454 = vpop.f32.mrf.mxu0
        %v455 = vadd.f32 %v406, %v454
        %v456 = vpop.f32.mrf.mxu0
        %v457 = vadd.f32 %v408, %v456
        %458 = vmatmul.bf16.gmra.mxu0 %v361
        %v459 = vpop.f32.mrf.mxu0
        %v460 = vadd.f32 %v411, %v459
        %v461 = vpop.f32.mrf.mxu0
        %v462 = vadd.f32 %v413, %v461
        %463 = vmatmul.bf16.gmra.mxu0 %v364
        %v464 = vpop.f32.mrf.mxu0
        %v465 = vadd.f32 %v416, %v464
        %v466 = vpop.f32.mrf.mxu0
        %v467 = vadd.f32 %v418, %v466
        %468 = vmatmul.bf16.gmra.mxu0 %v367
        %v469 = vpop.f32.mrf.mxu0
        %v470 = vadd.f32 %v421, %v469
        %v471 = vpop.f32.mrf.mxu0
        %v472 = vadd.f32 %v423, %v471
        %473 = vdwg.mxu0
        %v474 = vpack.c.bf16 %v435, %v435
        %v475 = vpack.c.bf16 %v437, %v437
        %v476 = vpack.c.bf16 %v440, %v440
        %v477 = vpack.c.bf16 %v442, %v442
        %v478 = vpack.c.bf16 %v445, %v445
        %v479 = vpack.c.bf16 %v447, %v447
        %v480 = vpack.c.bf16 %v450, %v450
        %v481 = vpack.c.bf16 %v452, %v452
        %v482 = vpack.c.bf16 %v455, %v455
        %v483 = vpack.c.bf16 %v457, %v457
        %v484 = vpack.c.bf16 %v460, %v460
        %v485 = vpack.c.bf16 %v462, %v462
        %v486 = vpack.c.bf16 %v465, %v465
        %v487 = vpack.c.bf16 %v467, %v467
        %v488 = vpack.c.bf16 %v470, %v470
        %v489 = vpack.c.bf16 %v472, %v472
        %vm490 = vcmask 519168
        %491 = vst.msk [vmem:[%s166] sm:$0xf] %vm490, %v474
        %492 = vst.msk [vmem:[%s166 + $0x4] sm:$0xf] %vm490, %v475
        %493 = vst.msk [vmem:[%s166 + $0x8] sm:$0xf] %vm490, %v476
        %494 = vst.msk [vmem:[%s166 + $0xc] sm:$0xf] %vm490, %v477
        %495 = vst.msk [vmem:[%s166 + $0x10] sm:$0xf] %vm490, %v478
        %496 = vst.msk [vmem:[%s166 + $0x14] sm:$0xf] %vm490, %v479
        %497 = vst.msk [vmem:[%s166 + $0x18] sm:$0xf] %vm490, %v480
        %498 = vst.msk [vmem:[%s166 + $0x1c] sm:$0xf] %vm490, %v481
        %499 = vst.msk [vmem:[%s166 + $0x20] sm:$0xf] %vm490, %v482
        %500 = vst.msk [vmem:[%s166 + $0x24] sm:$0xf] %vm490, %v483
        %501 = vst.msk [vmem:[%s166 + $0x28] sm:$0xf] %vm490, %v484
        %502 = vst.msk [vmem:[%s166 + $0x2c] sm:$0xf] %vm490, %v485
        %503 = vst.msk [vmem:[%s166 + $0x30] sm:$0xf] %vm490, %v486
        %504 = vst.msk [vmem:[%s166 + $0x34] sm:$0xf] %vm490, %v487
        %505 = vst.msk [vmem:[%s166 + $0x38] sm:$0xf] %vm490, %v488
        %506 = vst.msk [vmem:[%s166 + $0x3c] sm:$0xf] %vm490, %v489
        %v507 = vld [vmem:[%s172 + $0x80] sm:$0xff]
        %v508 = vld [vmem:[%s172 + $0x88] sm:$0xff]
        %v509 = vld [vmem:[%s172 + $0x90] sm:$0xff]
        %v510 = vld [vmem:[%s172 + $0x98] sm:$0xff]
        %v511 = vld [vmem:[%s172 + $0xa0] sm:$0xff]
        %v512 = vld [vmem:[%s172 + $0xa8] sm:$0xff]
        %v513 = vld [vmem:[%s172 + $0xb0] sm:$0xff]
        %v514 = vld [vmem:[%s172 + $0xb8] sm:$0xff]
        %v515 = vld [vmem:[%s172 + $0xc0] sm:$0xff]
        %v516 = vld [vmem:[%s172 + $0xc8] sm:$0xff]
        %v517 = vld [vmem:[%s172 + $0xd0] sm:$0xff]
        %v518 = vld [vmem:[%s172 + $0xd8] sm:$0xff]
        %v519 = vld [vmem:[%s172 + $0xe0] sm:$0xff]
        %v520 = vld [vmem:[%s172 + $0xe8] sm:$0xff]
        %v521 = vld [vmem:[%s172 + $0xf0] sm:$0xff]
        %v522 = vld [vmem:[%s172 + $0xf8] sm:$0xff]
        %v523 = vld [vmem:[%s1] sm:$0xf]
        %v524 = vld [vmem:[%s1 + $0x4] sm:$0xf]
        %v525 = vld [vmem:[%s1 + $0x8] sm:$0xf]
        %v526 = vld [vmem:[%s1 + $0xc] sm:$0xf]
        %v527 = vld [vmem:[%s1 + $0x10] sm:$0xf]
        %v528 = vld [vmem:[%s1 + $0x14] sm:$0xf]
        %v529 = vld [vmem:[%s1 + $0x18] sm:$0xf]
        %v530 = vld [vmem:[%s1 + $0x1c] sm:$0xf]
        %v531 = vld [vmem:[%s1 + $0x20] sm:$0xf]
        %v532 = vld [vmem:[%s1 + $0x24] sm:$0xf]
        %v533 = vld [vmem:[%s1 + $0x28] sm:$0xf]
        %v534 = vld [vmem:[%s1 + $0x2c] sm:$0xf]
        %v535 = vld [vmem:[%s1 + $0x30] sm:$0xf]
        %v536 = vld [vmem:[%s1 + $0x34] sm:$0xf]
        %v537 = vld [vmem:[%s1 + $0x38] sm:$0xf]
        %v538 = vld [vmem:[%s1 + $0x3c] sm:$0xf]
        %v539 = vld [vmem:[%s1 + $0x40] sm:$0xf]
        %v540 = vld [vmem:[%s1 + $0x44] sm:$0xf]
        %v541 = vld [vmem:[%s1 + $0x48] sm:$0x3]
        %v542 = vld [vmem:[%s2] sm:$0x1]
        %v544 = vperm.slane %v542, 0
        %v562 = vunpack.c.l.b16 %v507
        %v563 = vunpack.c.h.b16 %v507
        %v564 = vunpack.c.l.b16 %v508
        %v565 = vunpack.c.h.b16 %v508
        %v566 = vunpack.c.l.b16 %v509
        %v567 = vunpack.c.h.b16 %v509
        %v568 = vunpack.c.l.b16 %v510
        %v569 = vunpack.c.h.b16 %v510
        %v570 = vunpack.c.l.b16 %v511
        %v571 = vunpack.c.h.b16 %v511
        %v572 = vunpack.c.l.b16 %v512
        %v573 = vunpack.c.h.b16 %v512
        %v574 = vunpack.c.l.b16 %v513
        %v575 = vunpack.c.h.b16 %v513
        %v576 = vunpack.c.l.b16 %v514
        %v577 = vunpack.c.h.b16 %v514
        %v578 = vunpack.c.l.b16 %v515
        %v579 = vunpack.c.h.b16 %v515
        %v580 = vunpack.c.l.b16 %v516
        %v581 = vunpack.c.h.b16 %v516
        %v582 = vunpack.c.l.b16 %v517
        %v583 = vunpack.c.h.b16 %v517
        %v584 = vunpack.c.l.b16 %v518
        %v585 = vunpack.c.h.b16 %v518
        %v586 = vunpack.c.l.b16 %v519
        %v587 = vunpack.c.h.b16 %v519
        %v588 = vunpack.c.l.b16 %v520
        %v589 = vunpack.c.h.b16 %v520
        %v590 = vunpack.c.l.b16 %v521
        %v591 = vunpack.c.h.b16 %v521
        %v592 = vunpack.c.l.b16 %v522
        %v593 = vunpack.c.h.b16 %v522
        %v594 = vpack.c.b16 %v564, %v562
        %v595 = vpack.c.b16 %v565, %v563
        %v596 = vpack.c.b16 %v568, %v566
        %v597 = vpack.c.b16 %v569, %v567
        %v598 = vpack.c.b16 %v572, %v570
        %v599 = vpack.c.b16 %v573, %v571
        %v600 = vpack.c.b16 %v576, %v574
        %v601 = vpack.c.b16 %v577, %v575
        %v602 = vpack.c.b16 %v580, %v578
        %v603 = vpack.c.b16 %v581, %v579
        %v604 = vpack.c.b16 %v584, %v582
        %v605 = vpack.c.b16 %v585, %v583
        %v606 = vpack.c.b16 %v588, %v586
        %v607 = vpack.c.b16 %v589, %v587
        %v608 = vpack.c.b16 %v592, %v590
        %v609 = vpack.c.b16 %v593, %v591
        %v637 = vunpack.c.l.b16 %v523
        %v638 = vunpack.c.l.b16 %v524
        %v639 = vunpack.c.l.b16 %v525
        %v640 = vunpack.c.l.b16 %v526
        %v641 = vunpack.c.l.b16 %v527
        %v642 = vunpack.c.l.b16 %v528
        %v643 = vunpack.c.l.b16 %v529
        %v644 = vunpack.c.l.b16 %v530
        %v645 = vunpack.c.l.b16 %v531
        %v646 = vunpack.c.l.b16 %v532
        %v647 = vunpack.c.l.b16 %v533
        %v648 = vunpack.c.l.b16 %v534
        %v649 = vunpack.c.l.b16 %v535
        %v650 = vunpack.c.l.b16 %v536
        %v651 = vunpack.c.l.b16 %v537
        %v652 = vunpack.c.l.b16 %v538
        %v653 = vunpack.c.l.b16 %v539
        %v654 = vunpack.c.l.b16 %v540
        %v655 = vunpack.c.l.b16 %v541
        %v656 = vpack.c.b16 %v638, %v637
        %v657 = vpack.c.b16 %v640, %v639
        %v658 = vpack.c.b16 %v642, %v641
        %v659 = vpack.c.b16 %v644, %v643
        %v660 = vpack.c.b16 %v646, %v645
        %v661 = vpack.c.b16 %v648, %v647
        %v662 = vpack.c.b16 %v650, %v649
        %v663 = vpack.c.b16 %v652, %v651
        %v664 = vpack.c.b16 %v654, %v653
        %v665 = vpack.c.b16 %v655, %v655
        %v676 = vsel %vm344, %v595, 0
        %v679 = vsel %vm344, %v597, 0
        %v682 = vsel %vm344, %v599, 0
        %v685 = vsel %vm344, %v601, 0
        %v688 = vsel %vm344, %v603, 0
        %v691 = vsel %vm344, %v605, 0
        %v694 = vsel %vm344, %v607, 0
        %v697 = vsel %vm344, %v609, 0
        %v700 = vand.u32 %v665, %v372
        %702 = vmatpush.bf16.msra.mxu0 %v663
        %703 = vmatpush.bf16.msra.mxu0 %v662
        %704 = vmatpush.bf16.msra.mxu0 %v661
        %705 = vmatpush.bf16.msra.mxu0 %v660
        %706 = vmatpush.bf16.msra.mxu0 %v659
        %707 = vmatpush.bf16.msra.mxu0 %v658
        %708 = vmatpush.bf16.msra.mxu0 %v657
        %709 = vmatpush.bf16.msra.mxu0 %v656
        %710 = vmatmul.bf16.gmra.mxu0 %v594
        %v711 = vpop.f32.mrf.mxu0
        %v712 = vadd.f32 %v544, %v711
        %v713 = vpop.f32.mrf.mxu0
        %v714 = vadd.f32 %v544, %v713
        %715 = vmatmul.bf16.gmra.mxu0 %v596
        %v716 = vpop.f32.mrf.mxu0
        %v717 = vadd.f32 %v544, %v716
        %v718 = vpop.f32.mrf.mxu0
        %v719 = vadd.f32 %v544, %v718
        %720 = vmatmul.bf16.gmra.mxu0 %v598
        %v721 = vpop.f32.mrf.mxu0
        %v722 = vadd.f32 %v544, %v721
        %v723 = vpop.f32.mrf.mxu0
        %v724 = vadd.f32 %v544, %v723
        %725 = vmatmul.bf16.gmra.mxu0 %v600
        %v726 = vpop.f32.mrf.mxu0
        %v727 = vadd.f32 %v544, %v726
        %v728 = vpop.f32.mrf.mxu0
        %v729 = vadd.f32 %v544, %v728
        %730 = vmatmul.bf16.gmra.mxu0 %v602
        %v731 = vpop.f32.mrf.mxu0
        %v732 = vadd.f32 %v544, %v731
        %v733 = vpop.f32.mrf.mxu0
        %v734 = vadd.f32 %v544, %v733
        %735 = vmatmul.bf16.gmra.mxu0 %v604
        %v736 = vpop.f32.mrf.mxu0
        %v737 = vadd.f32 %v544, %v736
        %v738 = vpop.f32.mrf.mxu0
        %v739 = vadd.f32 %v544, %v738
        %740 = vmatmul.bf16.gmra.mxu0 %v606
        %v741 = vpop.f32.mrf.mxu0
        %v742 = vadd.f32 %v544, %v741
        %v743 = vpop.f32.mrf.mxu0
        %v744 = vadd.f32 %v544, %v743
        %745 = vmatmul.bf16.gmra.mxu0 %v608
        %v746 = vpop.f32.mrf.mxu0
        %v747 = vadd.f32 %v544, %v746
        %v748 = vpop.f32.mrf.mxu0
        %v749 = vadd.f32 %v544, %v748
        %750 = vdwg.mxu0
        %751 = vmatpush.bf16.msra.mxu0 0
        %752 = vmatpush.bf16.msra.mxu0 0
        %753 = vmatpush.bf16.msra.mxu0 0
        %754 = vmatpush.bf16.msra.mxu0 0
        %755 = vmatpush.bf16.msra.mxu0 0
        %756 = vmatpush.bf16.msra.mxu0 0
        %757 = vmatpush.bf16.msra.mxu0 %v700
        %758 = vmatpush.bf16.msra.mxu0 %v664
        %759 = vmatmul.bf16.gmra.mxu0 %v676
        %v760 = vpop.f32.mrf.mxu0
        %v761 = vadd.f32 %v712, %v760
        %v762 = vpop.f32.mrf.mxu0
        %v763 = vadd.f32 %v714, %v762
        %764 = vmatmul.bf16.gmra.mxu0 %v679
        %v765 = vpop.f32.mrf.mxu0
        %v766 = vadd.f32 %v717, %v765
        %v767 = vpop.f32.mrf.mxu0
        %v768 = vadd.f32 %v719, %v767
        %769 = vmatmul.bf16.gmra.mxu0 %v682
        %v770 = vpop.f32.mrf.mxu0
        %v771 = vadd.f32 %v722, %v770
        %v772 = vpop.f32.mrf.mxu0
        %v773 = vadd.f32 %v724, %v772
        %774 = vmatmul.bf16.gmra.mxu0 %v685
        %v775 = vpop.f32.mrf.mxu0
        %v776 = vadd.f32 %v727, %v775
        %v777 = vpop.f32.mrf.mxu0
        %v778 = vadd.f32 %v729, %v777
        %779 = vmatmul.bf16.gmra.mxu0 %v688
        %v780 = vpop.f32.mrf.mxu0
        %v781 = vadd.f32 %v732, %v780
        %v782 = vpop.f32.mrf.mxu0
        %v783 = vadd.f32 %v734, %v782
        %784 = vmatmul.bf16.gmra.mxu0 %v691
        %v785 = vpop.f32.mrf.mxu0
        %v786 = vadd.f32 %v737, %v785
        %v787 = vpop.f32.mrf.mxu0
        %v788 = vadd.f32 %v739, %v787
        %789 = vmatmul.bf16.gmra.mxu0 %v694
        %v790 = vpop.f32.mrf.mxu0
        %v791 = vadd.f32 %v742, %v790
        %v792 = vpop.f32.mrf.mxu0
        %v793 = vadd.f32 %v744, %v792
        %794 = vmatmul.bf16.gmra.mxu0 %v697
        %v795 = vpop.f32.mrf.mxu0
        %v796 = vadd.f32 %v747, %v795
        %v797 = vpop.f32.mrf.mxu0
        %v798 = vadd.f32 %v749, %v797
        %799 = vdwg.mxu0
        %v800 = vpack.c.bf16 %v761, %v761
        %v801 = vpack.c.bf16 %v763, %v763
        %v802 = vpack.c.bf16 %v766, %v766
        %v803 = vpack.c.bf16 %v768, %v768
        %v804 = vpack.c.bf16 %v771, %v771
        %v805 = vpack.c.bf16 %v773, %v773
        %v806 = vpack.c.bf16 %v776, %v776
        %v807 = vpack.c.bf16 %v778, %v778
        %v808 = vpack.c.bf16 %v781, %v781
        %v809 = vpack.c.bf16 %v783, %v783
        %v810 = vpack.c.bf16 %v786, %v786
        %v811 = vpack.c.bf16 %v788, %v788
        %v812 = vpack.c.bf16 %v791, %v791
        %v813 = vpack.c.bf16 %v793, %v793
        %v814 = vpack.c.bf16 %v796, %v796
        %v815 = vpack.c.bf16 %v798, %v798
        %816 = vst.msk [vmem:[%s166 + $0x40] sm:$0xf] %vm490, %v800
        %817 = vst.msk [vmem:[%s166 + $0x44] sm:$0xf] %vm490, %v801
        %818 = vst.msk [vmem:[%s166 + $0x48] sm:$0xf] %vm490, %v802
        %819 = vst.msk [vmem:[%s166 + $0x4c] sm:$0xf] %vm490, %v803
        %820 = vst.msk [vmem:[%s166 + $0x50] sm:$0xf] %vm490, %v804
        %821 = vst.msk [vmem:[%s166 + $0x54] sm:$0xf] %vm490, %v805
        %822 = vst.msk [vmem:[%s166 + $0x58] sm:$0xf] %vm490, %v806
        %823 = vst.msk [vmem:[%s166 + $0x5c] sm:$0xf] %vm490, %v807
        %824 = vst.msk [vmem:[%s166 + $0x60] sm:$0xf] %vm490, %v808
        %825 = vst.msk [vmem:[%s166 + $0x64] sm:$0xf] %vm490, %v809
        %826 = vst.msk [vmem:[%s166 + $0x68] sm:$0xf] %vm490, %v810
        %827 = vst.msk [vmem:[%s166 + $0x6c] sm:$0xf] %vm490, %v811
        %828 = vst.msk [vmem:[%s166 + $0x70] sm:$0xf] %vm490, %v812
        %829 = vst.msk [vmem:[%s166 + $0x74] sm:$0xf] %vm490, %v813
        %830 = vst.msk [vmem:[%s166 + $0x78] sm:$0xf] %vm490, %v814
        %831 = vst.msk [vmem:[%s166 + $0x7c] sm:$0xf] %vm490, %v815
        %v832 = vld [vmem:[%s172 + $0x100] sm:$0xff]
        %v833 = vld [vmem:[%s172 + $0x108] sm:$0xff]
        %v834 = vld [vmem:[%s172 + $0x110] sm:$0xff]
        %v835 = vld [vmem:[%s172 + $0x118] sm:$0xff]
        %v836 = vld [vmem:[%s172 + $0x120] sm:$0xff]
        %v837 = vld [vmem:[%s172 + $0x128] sm:$0xff]
        %v838 = vld [vmem:[%s172 + $0x130] sm:$0xff]
        %v839 = vld [vmem:[%s172 + $0x138] sm:$0xff]
        %v840 = vld [vmem:[%s172 + $0x140] sm:$0xff]
        %v841 = vld [vmem:[%s172 + $0x148] sm:$0xff]
        %v842 = vld [vmem:[%s172 + $0x150] sm:$0xff]
        %v843 = vld [vmem:[%s172 + $0x158] sm:$0xff]
        %v844 = vld [vmem:[%s172 + $0x160] sm:$0xff]
        %v845 = vld [vmem:[%s172 + $0x168] sm:$0xff]
        %v846 = vld [vmem:[%s172 + $0x170] sm:$0xff]
        %v847 = vld [vmem:[%s172 + $0x178] sm:$0xff]
        %v848 = vld [vmem:[%s1] sm:$0xf]
        %v849 = vld [vmem:[%s1 + $0x4] sm:$0xf]
        %v850 = vld [vmem:[%s1 + $0x8] sm:$0xf]
        %v851 = vld [vmem:[%s1 + $0xc] sm:$0xf]
        %v852 = vld [vmem:[%s1 + $0x10] sm:$0xf]
        %v853 = vld [vmem:[%s1 + $0x14] sm:$0xf]
        %v854 = vld [vmem:[%s1 + $0x18] sm:$0xf]
        %v855 = vld [vmem:[%s1 + $0x1c] sm:$0xf]
        %v856 = vld [vmem:[%s1 + $0x20] sm:$0xf]
        %v857 = vld [vmem:[%s1 + $0x24] sm:$0xf]
        %v858 = vld [vmem:[%s1 + $0x28] sm:$0xf]
        %v859 = vld [vmem:[%s1 + $0x2c] sm:$0xf]
        %v860 = vld [vmem:[%s1 + $0x30] sm:$0xf]
        %v861 = vld [vmem:[%s1 + $0x34] sm:$0xf]
        %v862 = vld [vmem:[%s1 + $0x38] sm:$0xf]
        %v863 = vld [vmem:[%s1 + $0x3c] sm:$0xf]
        %v864 = vld [vmem:[%s1 + $0x40] sm:$0xf]
        %v865 = vld [vmem:[%s1 + $0x44] sm:$0xf]
        %v866 = vld [vmem:[%s1 + $0x48] sm:$0x3]
        %v867 = vld [vmem:[%s2] sm:$0x1]
        %v869 = vperm.slane %v867, 0
        %v887 = vunpack.c.l.b16 %v832
        %v888 = vunpack.c.h.b16 %v832
        %v889 = vunpack.c.l.b16 %v833
        %v890 = vunpack.c.h.b16 %v833
        %v891 = vunpack.c.l.b16 %v834
        %v892 = vunpack.c.h.b16 %v834
        %v893 = vunpack.c.l.b16 %v835
        %v894 = vunpack.c.h.b16 %v835
        %v895 = vunpack.c.l.b16 %v836
        %v896 = vunpack.c.h.b16 %v836
        %v897 = vunpack.c.l.b16 %v837
        %v898 = vunpack.c.h.b16 %v837
        %v899 = vunpack.c.l.b16 %v838
        %v900 = vunpack.c.h.b16 %v838
        %v901 = vunpack.c.l.b16 %v839
        %v902 = vunpack.c.h.b16 %v839
        %v903 = vunpack.c.l.b16 %v840
        %v904 = vunpack.c.h.b16 %v840
        %v905 = vunpack.c.l.b16 %v841
        %v906 = vunpack.c.h.b16 %v841
        %v907 = vunpack.c.l.b16 %v842
        %v908 = vunpack.c.h.b16 %v842
        %v909 = vunpack.c.l.b16 %v843
        %v910 = vunpack.c.h.b16 %v843
        %v911 = vunpack.c.l.b16 %v844
        %v912 = vunpack.c.h.b16 %v844
        %v913 = vunpack.c.l.b16 %v845
        %v914 = vunpack.c.h.b16 %v845
        %v915 = vunpack.c.l.b16 %v846
        %v916 = vunpack.c.h.b16 %v846
        %v917 = vunpack.c.l.b16 %v847
        %v918 = vunpack.c.h.b16 %v847
        %v919 = vpack.c.b16 %v889, %v887
        %v920 = vpack.c.b16 %v890, %v888
        %v921 = vpack.c.b16 %v893, %v891
        %v922 = vpack.c.b16 %v894, %v892
        %v923 = vpack.c.b16 %v897, %v895
        %v924 = vpack.c.b16 %v898, %v896
        %v925 = vpack.c.b16 %v901, %v899
        %v926 = vpack.c.b16 %v902, %v900
        %v927 = vpack.c.b16 %v905, %v903
        %v928 = vpack.c.b16 %v906, %v904
        %v929 = vpack.c.b16 %v909, %v907
        %v930 = vpack.c.b16 %v910, %v908
        %v931 = vpack.c.b16 %v913, %v911
        %v932 = vpack.c.b16 %v914, %v912
        %v933 = vpack.c.b16 %v917, %v915
        %v934 = vpack.c.b16 %v918, %v916
        %v962 = vunpack.c.l.b16 %v848
        %v963 = vunpack.c.l.b16 %v849
        %v964 = vunpack.c.l.b16 %v850
        %v965 = vunpack.c.l.b16 %v851
        %v966 = vunpack.c.l.b16 %v852
        %v967 = vunpack.c.l.b16 %v853
        %v968 = vunpack.c.l.b16 %v854
        %v969 = vunpack.c.l.b16 %v855
        %v970 = vunpack.c.l.b16 %v856
        %v971 = vunpack.c.l.b16 %v857
        %v972 = vunpack.c.l.b16 %v858
        %v973 = vunpack.c.l.b16 %v859
        %v974 = vunpack.c.l.b16 %v860
        %v975 = vunpack.c.l.b16 %v861
        %v976 = vunpack.c.l.b16 %v862
        %v977 = vunpack.c.l.b16 %v863
        %v978 = vunpack.c.l.b16 %v864
        %v979 = vunpack.c.l.b16 %v865
        %v980 = vunpack.c.l.b16 %v866
        %v981 = vpack.c.b16 %v963, %v962
        %v982 = vpack.c.b16 %v965, %v964
        %v983 = vpack.c.b16 %v967, %v966
        %v984 = vpack.c.b16 %v969, %v968
        %v985 = vpack.c.b16 %v971, %v970
        %v986 = vpack.c.b16 %v973, %v972
        %v987 = vpack.c.b16 %v975, %v974
        %v988 = vpack.c.b16 %v977, %v976
        %v989 = vpack.c.b16 %v979, %v978
        %v990 = vpack.c.b16 %v980, %v980
        %v1001 = vsel %vm344, %v920, 0
        %v1004 = vsel %vm344, %v922, 0
        %v1007 = vsel %vm344, %v924, 0
        %v1010 = vsel %vm344, %v926, 0
        %v1013 = vsel %vm344, %v928, 0
        %v1016 = vsel %vm344, %v930, 0
        %v1019 = vsel %vm344, %v932, 0
        %v1022 = vsel %vm344, %v934, 0
        %v1025 = vand.u32 %v990, %v372
        %1027 = vmatpush.bf16.msra.mxu0 %v988
        %1028 = vmatpush.bf16.msra.mxu0 %v987
        %1029 = vmatpush.bf16.msra.mxu0 %v986
        %1030 = vmatpush.bf16.msra.mxu0 %v985
        %1031 = vmatpush.bf16.msra.mxu0 %v984
        %1032 = vmatpush.bf16.msra.mxu0 %v983
        %1033 = vmatpush.bf16.msra.mxu0 %v982
        %1034 = vmatpush.bf16.msra.mxu0 %v981
        %1035 = vmatmul.bf16.gmra.mxu0 %v919
        %v1036 = vpop.f32.mrf.mxu0
        %v1037 = vadd.f32 %v869, %v1036
        %v1038 = vpop.f32.mrf.mxu0
        %v1039 = vadd.f32 %v869, %v1038
        %1040 = vmatmul.bf16.gmra.mxu0 %v921
        %v1041 = vpop.f32.mrf.mxu0
        %v1042 = vadd.f32 %v869, %v1041
        %v1043 = vpop.f32.mrf.mxu0
        %v1044 = vadd.f32 %v869, %v1043
        %1045 = vmatmul.bf16.gmra.mxu0 %v923
        %v1046 = vpop.f32.mrf.mxu0
        %v1047 = vadd.f32 %v869, %v1046
        %v1048 = vpop.f32.mrf.mxu0
        %v1049 = vadd.f32 %v869, %v1048
        %1050 = vmatmul.bf16.gmra.mxu0 %v925
        %v1051 = vpop.f32.mrf.mxu0
        %v1052 = vadd.f32 %v869, %v1051
        %v1053 = vpop.f32.mrf.mxu0
        %v1054 = vadd.f32 %v869, %v1053
        %1055 = vmatmul.bf16.gmra.mxu0 %v927
        %v1056 = vpop.f32.mrf.mxu0
        %v1057 = vadd.f32 %v869, %v1056
        %v1058 = vpop.f32.mrf.mxu0
        %v1059 = vadd.f32 %v869, %v1058
        %1060 = vmatmul.bf16.gmra.mxu0 %v929
        %v1061 = vpop.f32.mrf.mxu0
        %v1062 = vadd.f32 %v869, %v1061
        %v1063 = vpop.f32.mrf.mxu0
        %v1064 = vadd.f32 %v869, %v1063
        %1065 = vmatmul.bf16.gmra.mxu0 %v931
        %v1066 = vpop.f32.mrf.mxu0
        %v1067 = vadd.f32 %v869, %v1066
        %v1068 = vpop.f32.mrf.mxu0
        %v1069 = vadd.f32 %v869, %v1068
        %1070 = vmatmul.bf16.gmra.mxu0 %v933
        %v1071 = vpop.f32.mrf.mxu0
        %v1072 = vadd.f32 %v869, %v1071
        %v1073 = vpop.f32.mrf.mxu0
        %v1074 = vadd.f32 %v869, %v1073
        %1075 = vdwg.mxu0
        %1076 = vmatpush.bf16.msra.mxu0 0
        %1077 = vmatpush.bf16.msra.mxu0 0
        %1078 = vmatpush.bf16.msra.mxu0 0
        %1079 = vmatpush.bf16.msra.mxu0 0
        %1080 = vmatpush.bf16.msra.mxu0 0
        %1081 = vmatpush.bf16.msra.mxu0 0
        %1082 = vmatpush.bf16.msra.mxu0 %v1025
        %1083 = vmatpush.bf16.msra.mxu0 %v989
        %1084 = vmatmul.bf16.gmra.mxu0 %v1001
        %v1085 = vpop.f32.mrf.mxu0
        %v1086 = vadd.f32 %v1037, %v1085
        %v1087 = vpop.f32.mrf.mxu0
        %v1088 = vadd.f32 %v1039, %v1087
        %1089 = vmatmul.bf16.gmra.mxu0 %v1004
        %v1090 = vpop.f32.mrf.mxu0
        %v1091 = vadd.f32 %v1042, %v1090
        %v1092 = vpop.f32.mrf.mxu0
        %v1093 = vadd.f32 %v1044, %v1092
        %1094 = vmatmul.bf16.gmra.mxu0 %v1007
        %v1095 = vpop.f32.mrf.mxu0
        %v1096 = vadd.f32 %v1047, %v1095
        %v1097 = vpop.f32.mrf.mxu0
        %v1098 = vadd.f32 %v1049, %v1097
        %1099 = vmatmul.bf16.gmra.mxu0 %v1010
        %v1100 = vpop.f32.mrf.mxu0
        %v1101 = vadd.f32 %v1052, %v1100
        %v1102 = vpop.f32.mrf.mxu0
        %v1103 = vadd.f32 %v1054, %v1102
        %1104 = vmatmul.bf16.gmra.mxu0 %v1013
        %v1105 = vpop.f32.mrf.mxu0
        %v1106 = vadd.f32 %v1057, %v1105
        %v1107 = vpop.f32.mrf.mxu0
        %v1108 = vadd.f32 %v1059, %v1107
        %1109 = vmatmul.bf16.gmra.mxu0 %v1016
        %v1110 = vpop.f32.mrf.mxu0
        %v1111 = vadd.f32 %v1062, %v1110
        %v1112 = vpop.f32.mrf.mxu0
        %v1113 = vadd.f32 %v1064, %v1112
        %1114 = vmatmul.bf16.gmra.mxu0 %v1019
        %v1115 = vpop.f32.mrf.mxu0
        %v1116 = vadd.f32 %v1067, %v1115
        %v1117 = vpop.f32.mrf.mxu0
        %v1118 = vadd.f32 %v1069, %v1117
        %1119 = vmatmul.bf16.gmra.mxu0 %v1022
        %v1120 = vpop.f32.mrf.mxu0
        %v1121 = vadd.f32 %v1072, %v1120
        %v1122 = vpop.f32.mrf.mxu0
        %v1123 = vadd.f32 %v1074, %v1122
        %1124 = vdwg.mxu0
        %v1125 = vpack.c.bf16 %v1086, %v1086
        %v1126 = vpack.c.bf16 %v1088, %v1088
        %v1127 = vpack.c.bf16 %v1091, %v1091
        %v1128 = vpack.c.bf16 %v1093, %v1093
        %v1129 = vpack.c.bf16 %v1096, %v1096
        %v1130 = vpack.c.bf16 %v1098, %v1098
        %v1131 = vpack.c.bf16 %v1101, %v1101
        %v1132 = vpack.c.bf16 %v1103, %v1103
        %v1133 = vpack.c.bf16 %v1106, %v1106
        %v1134 = vpack.c.bf16 %v1108, %v1108
        %v1135 = vpack.c.bf16 %v1111, %v1111
        %v1136 = vpack.c.bf16 %v1113, %v1113
        %v1137 = vpack.c.bf16 %v1116, %v1116
        %v1138 = vpack.c.bf16 %v1118, %v1118
        %v1139 = vpack.c.bf16 %v1121, %v1121
        %v1140 = vpack.c.bf16 %v1123, %v1123
        %1141 = vst.msk [vmem:[%s166 + $0x80] sm:$0xf] %vm490, %v1125
        %1142 = vst.msk [vmem:[%s166 + $0x84] sm:$0xf] %vm490, %v1126
        %1143 = vst.msk [vmem:[%s166 + $0x88] sm:$0xf] %vm490, %v1127
        %1144 = vst.msk [vmem:[%s166 + $0x8c] sm:$0xf] %vm490, %v1128
        %1145 = vst.msk [vmem:[%s166 + $0x90] sm:$0xf] %vm490, %v1129
        %1146 = vst.msk [vmem:[%s166 + $0x94] sm:$0xf] %vm490, %v1130
        %1147 = vst.msk [vmem:[%s166 + $0x98] sm:$0xf] %vm490, %v1131
        %1148 = vst.msk [vmem:[%s166 + $0x9c] sm:$0xf] %vm490, %v1132
        %1149 = vst.msk [vmem:[%s166 + $0xa0] sm:$0xf] %vm490, %v1133
        %1150 = vst.msk [vmem:[%s166 + $0xa4] sm:$0xf] %vm490, %v1134
        %1151 = vst.msk [vmem:[%s166 + $0xa8] sm:$0xf] %vm490, %v1135
        %1152 = vst.msk [vmem:[%s166 + $0xac] sm:$0xf] %vm490, %v1136
        %1153 = vst.msk [vmem:[%s166 + $0xb0] sm:$0xf] %vm490, %v1137
        %1154 = vst.msk [vmem:[%s166 + $0xb4] sm:$0xf] %vm490, %v1138
        %1155 = vst.msk [vmem:[%s166 + $0xb8] sm:$0xf] %vm490, %v1139
        %1156 = vst.msk [vmem:[%s166 + $0xbc] sm:$0xf] %vm490, %v1140
        %v1157 = vld [vmem:[%s172 + $0x180] sm:$0xff]
        %v1158 = vld [vmem:[%s172 + $0x188] sm:$0xff]
        %v1159 = vld [vmem:[%s172 + $0x190] sm:$0xff]
        %v1160 = vld [vmem:[%s172 + $0x198] sm:$0xff]
        %v1161 = vld [vmem:[%s172 + $0x1a0] sm:$0xff]
        %v1162 = vld [vmem:[%s172 + $0x1a8] sm:$0xff]
        %v1163 = vld [vmem:[%s172 + $0x1b0] sm:$0xff]
        %v1164 = vld [vmem:[%s172 + $0x1b8] sm:$0xff]
        %v1165 = vld [vmem:[%s172 + $0x1c0] sm:$0xff]
        %v1166 = vld [vmem:[%s172 + $0x1c8] sm:$0xff]
        %v1167 = vld [vmem:[%s172 + $0x1d0] sm:$0xff]
        %v1168 = vld [vmem:[%s172 + $0x1d8] sm:$0xff]
        %v1169 = vld [vmem:[%s172 + $0x1e0] sm:$0xff]
        %v1170 = vld [vmem:[%s172 + $0x1e8] sm:$0xff]
        %v1171 = vld [vmem:[%s172 + $0x1f0] sm:$0xff]
        %v1172 = vld [vmem:[%s172 + $0x1f8] sm:$0xff]
        %v1173 = vld [vmem:[%s1] sm:$0xf]
        %v1174 = vld [vmem:[%s1 + $0x4] sm:$0xf]
        %v1175 = vld [vmem:[%s1 + $0x8] sm:$0xf]
        %v1176 = vld [vmem:[%s1 + $0xc] sm:$0xf]
        %v1177 = vld [vmem:[%s1 + $0x10] sm:$0xf]
        %v1178 = vld [vmem:[%s1 + $0x14] sm:$0xf]
        %v1179 = vld [vmem:[%s1 + $0x18] sm:$0xf]
        %v1180 = vld [vmem:[%s1 + $0x1c] sm:$0xf]
        %v1181 = vld [vmem:[%s1 + $0x20] sm:$0xf]
        %v1182 = vld [vmem:[%s1 + $0x24] sm:$0xf]
        %v1183 = vld [vmem:[%s1 + $0x28] sm:$0xf]
        %v1184 = vld [vmem:[%s1 + $0x2c] sm:$0xf]
        %v1185 = vld [vmem:[%s1 + $0x30] sm:$0xf]
        %v1186 = vld [vmem:[%s1 + $0x34] sm:$0xf]
        %v1187 = vld [vmem:[%s1 + $0x38] sm:$0xf]
        %v1188 = vld [vmem:[%s1 + $0x3c] sm:$0xf]
        %v1189 = vld [vmem:[%s1 + $0x40] sm:$0xf]
        %v1190 = vld [vmem:[%s1 + $0x44] sm:$0xf]
        %v1191 = vld [vmem:[%s1 + $0x48] sm:$0x3]
        %v1192 = vld [vmem:[%s2] sm:$0x1]
        %v1194 = vperm.slane %v1192, 0
        %v1212 = vunpack.c.l.b16 %v1157
        %v1213 = vunpack.c.h.b16 %v1157
        %v1214 = vunpack.c.l.b16 %v1158
        %v1215 = vunpack.c.h.b16 %v1158
        %v1216 = vunpack.c.l.b16 %v1159
        %v1217 = vunpack.c.h.b16 %v1159
        %v1218 = vunpack.c.l.b16 %v1160
        %v1219 = vunpack.c.h.b16 %v1160
        %v1220 = vunpack.c.l.b16 %v1161
        %v1221 = vunpack.c.h.b16 %v1161
        %v1222 = vunpack.c.l.b16 %v1162
        %v1223 = vunpack.c.h.b16 %v1162
        %v1224 = vunpack.c.l.b16 %v1163
        %v1225 = vunpack.c.h.b16 %v1163
        %v1226 = vunpack.c.l.b16 %v1164
        %v1227 = vunpack.c.h.b16 %v1164
        %v1228 = vunpack.c.l.b16 %v1165
        %v1229 = vunpack.c.h.b16 %v1165
        %v1230 = vunpack.c.l.b16 %v1166
        %v1231 = vunpack.c.h.b16 %v1166
        %v1232 = vunpack.c.l.b16 %v1167
        %v1233 = vunpack.c.h.b16 %v1167
        %v1234 = vunpack.c.l.b16 %v1168
        %v1235 = vunpack.c.h.b16 %v1168
        %v1236 = vunpack.c.l.b16 %v1169
        %v1237 = vunpack.c.h.b16 %v1169
        %v1238 = vunpack.c.l.b16 %v1170
        %v1239 = vunpack.c.h.b16 %v1170
        %v1240 = vunpack.c.l.b16 %v1171
        %v1241 = vunpack.c.h.b16 %v1171
        %v1242 = vunpack.c.l.b16 %v1172
        %v1243 = vunpack.c.h.b16 %v1172
        %v1244 = vpack.c.b16 %v1214, %v1212
        %v1245 = vpack.c.b16 %v1215, %v1213
        %v1246 = vpack.c.b16 %v1218, %v1216
        %v1247 = vpack.c.b16 %v1219, %v1217
        %v1248 = vpack.c.b16 %v1222, %v1220
        %v1249 = vpack.c.b16 %v1223, %v1221
        %v1250 = vpack.c.b16 %v1226, %v1224
        %v1251 = vpack.c.b16 %v1227, %v1225
        %v1252 = vpack.c.b16 %v1230, %v1228
        %v1253 = vpack.c.b16 %v1231, %v1229
        %v1254 = vpack.c.b16 %v1234, %v1232
        %v1255 = vpack.c.b16 %v1235, %v1233
        %v1256 = vpack.c.b16 %v1238, %v1236
        %v1257 = vpack.c.b16 %v1239, %v1237
        %v1258 = vpack.c.b16 %v1242, %v1240
        %v1259 = vpack.c.b16 %v1243, %v1241
        %v1287 = vunpack.c.l.b16 %v1173
        %v1288 = vunpack.c.l.b16 %v1174
        %v1289 = vunpack.c.l.b16 %v1175
        %v1290 = vunpack.c.l.b16 %v1176
        %v1291 = vunpack.c.l.b16 %v1177
        %v1292 = vunpack.c.l.b16 %v1178
        %v1293 = vunpack.c.l.b16 %v1179
        %v1294 = vunpack.c.l.b16 %v1180
        %v1295 = vunpack.c.l.b16 %v1181
        %v1296 = vunpack.c.l.b16 %v1182
        %v1297 = vunpack.c.l.b16 %v1183
        %v1298 = vunpack.c.l.b16 %v1184
        %v1299 = vunpack.c.l.b16 %v1185
        %v1300 = vunpack.c.l.b16 %v1186
        %v1301 = vunpack.c.l.b16 %v1187
        %v1302 = vunpack.c.l.b16 %v1188
        %v1303 = vunpack.c.l.b16 %v1189
        %v1304 = vunpack.c.l.b16 %v1190
        %v1305 = vunpack.c.l.b16 %v1191
        %v1306 = vpack.c.b16 %v1288, %v1287
        %v1307 = vpack.c.b16 %v1290, %v1289
        %v1308 = vpack.c.b16 %v1292, %v1291
        %v1309 = vpack.c.b16 %v1294, %v1293
        %v1310 = vpack.c.b16 %v1296, %v1295
        %v1311 = vpack.c.b16 %v1298, %v1297
        %v1312 = vpack.c.b16 %v1300, %v1299
        %v1313 = vpack.c.b16 %v1302, %v1301
        %v1314 = vpack.c.b16 %v1304, %v1303
        %v1315 = vpack.c.b16 %v1305, %v1305
        %v1326 = vsel %vm344, %v1245, 0
        %v1329 = vsel %vm344, %v1247, 0
        %v1332 = vsel %vm344, %v1249, 0
        %v1335 = vsel %vm344, %v1251, 0
        %v1338 = vsel %vm344, %v1253, 0
        %v1341 = vsel %vm344, %v1255, 0
        %v1344 = vsel %vm344, %v1257, 0
        %v1347 = vsel %vm344, %v1259, 0
        %v1350 = vand.u32 %v1315, %v372
        %1352 = vmatpush.bf16.msra.mxu0 %v1313
        %1353 = vmatpush.bf16.msra.mxu0 %v1312
        %1354 = vmatpush.bf16.msra.mxu0 %v1311
        %1355 = vmatpush.bf16.msra.mxu0 %v1310
        %1356 = vmatpush.bf16.msra.mxu0 %v1309
        %1357 = vmatpush.bf16.msra.mxu0 %v1308
        %1358 = vmatpush.bf16.msra.mxu0 %v1307
        %1359 = vmatpush.bf16.msra.mxu0 %v1306
        %1360 = vmatmul.bf16.gmra.mxu0 %v1244
        %v1361 = vpop.f32.mrf.mxu0
        %v1362 = vadd.f32 %v1194, %v1361
        %v1363 = vpop.f32.mrf.mxu0
        %v1364 = vadd.f32 %v1194, %v1363
        %1365 = vmatmul.bf16.gmra.mxu0 %v1246
        %v1366 = vpop.f32.mrf.mxu0
        %v1367 = vadd.f32 %v1194, %v1366
        %v1368 = vpop.f32.mrf.mxu0
        %v1369 = vadd.f32 %v1194, %v1368
        %1370 = vmatmul.bf16.gmra.mxu0 %v1248
        %v1371 = vpop.f32.mrf.mxu0
        %v1372 = vadd.f32 %v1194, %v1371
        %v1373 = vpop.f32.mrf.mxu0
        %v1374 = vadd.f32 %v1194, %v1373
        %1375 = vmatmul.bf16.gmra.mxu0 %v1250
        %v1376 = vpop.f32.mrf.mxu0
        %v1377 = vadd.f32 %v1194, %v1376
        %v1378 = vpop.f32.mrf.mxu0
        %v1379 = vadd.f32 %v1194, %v1378
        %1380 = vmatmul.bf16.gmra.mxu0 %v1252
        %v1381 = vpop.f32.mrf.mxu0
        %v1382 = vadd.f32 %v1194, %v1381
        %v1383 = vpop.f32.mrf.mxu0
        %v1384 = vadd.f32 %v1194, %v1383
        %1385 = vmatmul.bf16.gmra.mxu0 %v1254
        %v1386 = vpop.f32.mrf.mxu0
        %v1387 = vadd.f32 %v1194, %v1386
        %v1388 = vpop.f32.mrf.mxu0
        %v1389 = vadd.f32 %v1194, %v1388
        %1390 = vmatmul.bf16.gmra.mxu0 %v1256
        %v1391 = vpop.f32.mrf.mxu0
        %v1392 = vadd.f32 %v1194, %v1391
        %v1393 = vpop.f32.mrf.mxu0
        %v1394 = vadd.f32 %v1194, %v1393
        %1395 = vmatmul.bf16.gmra.mxu0 %v1258
        %v1396 = vpop.f32.mrf.mxu0
        %v1397 = vadd.f32 %v1194, %v1396
        %v1398 = vpop.f32.mrf.mxu0
        %v1399 = vadd.f32 %v1194, %v1398
        %1400 = vdwg.mxu0
        %1401 = vmatpush.bf16.msra.mxu0 0
        %1402 = vmatpush.bf16.msra.mxu0 0
        %1403 = vmatpush.bf16.msra.mxu0 0
        %1404 = vmatpush.bf16.msra.mxu0 0
        %1405 = vmatpush.bf16.msra.mxu0 0
        %1406 = vmatpush.bf16.msra.mxu0 0
        %1407 = vmatpush.bf16.msra.mxu0 %v1350
        %1408 = vmatpush.bf16.msra.mxu0 %v1314
        %1409 = vmatmul.bf16.gmra.mxu0 %v1326
        %v1410 = vpop.f32.mrf.mxu0
        %v1411 = vadd.f32 %v1362, %v1410
        %v1412 = vpop.f32.mrf.mxu0
        %v1413 = vadd.f32 %v1364, %v1412
        %1414 = vmatmul.bf16.gmra.mxu0 %v1329
        %v1415 = vpop.f32.mrf.mxu0
        %v1416 = vadd.f32 %v1367, %v1415
        %v1417 = vpop.f32.mrf.mxu0
        %v1418 = vadd.f32 %v1369, %v1417
        %1419 = vmatmul.bf16.gmra.mxu0 %v1332
        %v1420 = vpop.f32.mrf.mxu0
        %v1421 = vadd.f32 %v1372, %v1420
        %v1422 = vpop.f32.mrf.mxu0
        %v1423 = vadd.f32 %v1374, %v1422
        %1424 = vmatmul.bf16.gmra.mxu0 %v1335
        %v1425 = vpop.f32.mrf.mxu0
        %v1426 = vadd.f32 %v1377, %v1425
        %v1427 = vpop.f32.mrf.mxu0
        %v1428 = vadd.f32 %v1379, %v1427
        %1429 = vmatmul.bf16.gmra.mxu0 %v1338
        %v1430 = vpop.f32.mrf.mxu0
        %v1431 = vadd.f32 %v1382, %v1430
        %v1432 = vpop.f32.mrf.mxu0
        %v1433 = vadd.f32 %v1384, %v1432
        %1434 = vmatmul.bf16.gmra.mxu0 %v1341
        %v1435 = vpop.f32.mrf.mxu0
        %v1436 = vadd.f32 %v1387, %v1435
        %v1437 = vpop.f32.mrf.mxu0
        %v1438 = vadd.f32 %v1389, %v1437
        %1439 = vmatmul.bf16.gmra.mxu0 %v1344
        %v1440 = vpop.f32.mrf.mxu0
        %v1441 = vadd.f32 %v1392, %v1440
        %v1442 = vpop.f32.mrf.mxu0
        %v1443 = vadd.f32 %v1394, %v1442
        %1444 = vmatmul.bf16.gmra.mxu0 %v1347
        %v1445 = vpop.f32.mrf.mxu0
        %v1446 = vadd.f32 %v1397, %v1445
        %v1447 = vpop.f32.mrf.mxu0
        %v1448 = vadd.f32 %v1399, %v1447
        %1449 = vdwg.mxu0
        %v1450 = vpack.c.bf16 %v1411, %v1411
        %v1451 = vpack.c.bf16 %v1413, %v1413
        %v1452 = vpack.c.bf16 %v1416, %v1416
        %v1453 = vpack.c.bf16 %v1418, %v1418
        %v1454 = vpack.c.bf16 %v1421, %v1421
        %v1455 = vpack.c.bf16 %v1423, %v1423
        %v1456 = vpack.c.bf16 %v1426, %v1426
        %v1457 = vpack.c.bf16 %v1428, %v1428
        %v1458 = vpack.c.bf16 %v1431, %v1431
        %v1459 = vpack.c.bf16 %v1433, %v1433
        %v1460 = vpack.c.bf16 %v1436, %v1436
        %v1461 = vpack.c.bf16 %v1438, %v1438
        %v1462 = vpack.c.bf16 %v1441, %v1441
        %v1463 = vpack.c.bf16 %v1443, %v1443
        %v1464 = vpack.c.bf16 %v1446, %v1446
        %v1465 = vpack.c.bf16 %v1448, %v1448
        %1466 = vst.msk [vmem:[%s166 + $0xc0] sm:$0xf] %vm490, %v1450
        %1467 = vst.msk [vmem:[%s166 + $0xc4] sm:$0xf] %vm490, %v1451
        %1468 = vst.msk [vmem:[%s166 + $0xc8] sm:$0xf] %vm490, %v1452
        %1469 = vst.msk [vmem:[%s166 + $0xcc] sm:$0xf] %vm490, %v1453
        %1470 = vst.msk [vmem:[%s166 + $0xd0] sm:$0xf] %vm490, %v1454
        %1471 = vst.msk [vmem:[%s166 + $0xd4] sm:$0xf] %vm490, %v1455
        %1472 = vst.msk [vmem:[%s166 + $0xd8] sm:$0xf] %vm490, %v1456
        %1473 = vst.msk [vmem:[%s166 + $0xdc] sm:$0xf] %vm490, %v1457
        %1474 = vst.msk [vmem:[%s166 + $0xe0] sm:$0xf] %vm490, %v1458
        %1475 = vst.msk [vmem:[%s166 + $0xe4] sm:$0xf] %vm490, %v1459
        %1476 = vst.msk [vmem:[%s166 + $0xe8] sm:$0xf] %vm490, %v1460
        %1477 = vst.msk [vmem:[%s166 + $0xec] sm:$0xf] %vm490, %v1461
        %1478 = vst.msk [vmem:[%s166 + $0xf0] sm:$0xf] %vm490, %v1462
        %1479 = vst.msk [vmem:[%s166 + $0xf4] sm:$0xf] %vm490, %v1463
        %1480 = vst.msk [vmem:[%s166 + $0xf8] sm:$0xf] %vm490, %v1464
        %1481 = vst.msk [vmem:[%s166 + $0xfc] sm:$0xf] %vm490, %v1465
        %v1482 = vld [vmem:[%s172 + $0x200] sm:$0xff]
        %v1483 = vld [vmem:[%s172 + $0x208] sm:$0xff]
        %v1484 = vld [vmem:[%s172 + $0x210] sm:$0xff]
        %v1485 = vld [vmem:[%s172 + $0x218] sm:$0xff]
        %v1486 = vld [vmem:[%s172 + $0x220] sm:$0xff]
        %v1487 = vld [vmem:[%s172 + $0x228] sm:$0xff]
        %v1488 = vld [vmem:[%s172 + $0x230] sm:$0xff]
        %v1489 = vld [vmem:[%s172 + $0x238] sm:$0xff]
        %v1490 = vld [vmem:[%s172 + $0x240] sm:$0xff]
        %v1491 = vld [vmem:[%s172 + $0x248] sm:$0xff]
        %v1492 = vld [vmem:[%s172 + $0x250] sm:$0xff]
        %v1493 = vld [vmem:[%s172 + $0x258] sm:$0xff]
        %v1494 = vld [vmem:[%s172 + $0x260] sm:$0xff]
        %v1495 = vld [vmem:[%s172 + $0x268] sm:$0xff]
        %v1496 = vld [vmem:[%s172 + $0x270] sm:$0xff]
        %v1497 = vld [vmem:[%s172 + $0x278] sm:$0xff]
        %v1498 = vld [vmem:[%s1] sm:$0xf]
        %v1499 = vld [vmem:[%s1 + $0x4] sm:$0xf]
        %v1500 = vld [vmem:[%s1 + $0x8] sm:$0xf]
        %v1501 = vld [vmem:[%s1 + $0xc] sm:$0xf]
        %v1502 = vld [vmem:[%s1 + $0x10] sm:$0xf]
        %v1503 = vld [vmem:[%s1 + $0x14] sm:$0xf]
        %v1504 = vld [vmem:[%s1 + $0x18] sm:$0xf]
        %v1505 = vld [vmem:[%s1 + $0x1c] sm:$0xf]
        %v1506 = vld [vmem:[%s1 + $0x20] sm:$0xf]
        %v1507 = vld [vmem:[%s1 + $0x24] sm:$0xf]
        %v1508 = vld [vmem:[%s1 + $0x28] sm:$0xf]
        %v1509 = vld [vmem:[%s1 + $0x2c] sm:$0xf]
        %v1510 = vld [vmem:[%s1 + $0x30] sm:$0xf]
        %v1511 = vld [vmem:[%s1 + $0x34] sm:$0xf]
        %v1512 = vld [vmem:[%s1 + $0x38] sm:$0xf]
        %v1513 = vld [vmem:[%s1 + $0x3c] sm:$0xf]
        %v1514 = vld [vmem:[%s1 + $0x40] sm:$0xf]
        %v1515 = vld [vmem:[%s1 + $0x44] sm:$0xf]
        %v1516 = vld [vmem:[%s1 + $0x48] sm:$0x3]
        %v1517 = vld [vmem:[%s2] sm:$0x1]
        %v1519 = vperm.slane %v1517, 0
        %v1537 = vunpack.c.l.b16 %v1482
        %v1538 = vunpack.c.h.b16 %v1482
        %v1539 = vunpack.c.l.b16 %v1483
        %v1540 = vunpack.c.h.b16 %v1483
        %v1541 = vunpack.c.l.b16 %v1484
        %v1542 = vunpack.c.h.b16 %v1484
        %v1543 = vunpack.c.l.b16 %v1485
        %v1544 = vunpack.c.h.b16 %v1485
        %v1545 = vunpack.c.l.b16 %v1486
        %v1546 = vunpack.c.h.b16 %v1486
        %v1547 = vunpack.c.l.b16 %v1487
        %v1548 = vunpack.c.h.b16 %v1487
        %v1549 = vunpack.c.l.b16 %v1488
        %v1550 = vunpack.c.h.b16 %v1488
        %v1551 = vunpack.c.l.b16 %v1489
        %v1552 = vunpack.c.h.b16 %v1489
        %v1553 = vunpack.c.l.b16 %v1490
        %v1554 = vunpack.c.h.b16 %v1490
        %v1555 = vunpack.c.l.b16 %v1491
        %v1556 = vunpack.c.h.b16 %v1491
        %v1557 = vunpack.c.l.b16 %v1492
        %v1558 = vunpack.c.h.b16 %v1492
        %v1559 = vunpack.c.l.b16 %v1493
        %v1560 = vunpack.c.h.b16 %v1493
        %v1561 = vunpack.c.l.b16 %v1494
        %v1562 = vunpack.c.h.b16 %v1494
        %v1563 = vunpack.c.l.b16 %v1495
        %v1564 = vunpack.c.h.b16 %v1495
        %v1565 = vunpack.c.l.b16 %v1496
        %v1566 = vunpack.c.h.b16 %v1496
        %v1567 = vunpack.c.l.b16 %v1497
        %v1568 = vunpack.c.h.b16 %v1497
        %v1569 = vpack.c.b16 %v1539, %v1537
        %v1570 = vpack.c.b16 %v1540, %v1538
        %v1571 = vpack.c.b16 %v1543, %v1541
        %v1572 = vpack.c.b16 %v1544, %v1542
        %v1573 = vpack.c.b16 %v1547, %v1545
        %v1574 = vpack.c.b16 %v1548, %v1546
        %v1575 = vpack.c.b16 %v1551, %v1549
        %v1576 = vpack.c.b16 %v1552, %v1550
        %v1577 = vpack.c.b16 %v1555, %v1553
        %v1578 = vpack.c.b16 %v1556, %v1554
        %v1579 = vpack.c.b16 %v1559, %v1557
        %v1580 = vpack.c.b16 %v1560, %v1558
        %v1581 = vpack.c.b16 %v1563, %v1561
        %v1582 = vpack.c.b16 %v1564, %v1562
        %v1583 = vpack.c.b16 %v1567, %v1565
        %v1584 = vpack.c.b16 %v1568, %v1566
        %v1612 = vunpack.c.l.b16 %v1498
        %v1613 = vunpack.c.l.b16 %v1499
        %v1614 = vunpack.c.l.b16 %v1500
        %v1615 = vunpack.c.l.b16 %v1501
        %v1616 = vunpack.c.l.b16 %v1502
        %v1617 = vunpack.c.l.b16 %v1503
        %v1618 = vunpack.c.l.b16 %v1504
        %v1619 = vunpack.c.l.b16 %v1505
        %v1620 = vunpack.c.l.b16 %v1506
        %v1621 = vunpack.c.l.b16 %v1507
        %v1622 = vunpack.c.l.b16 %v1508
        %v1623 = vunpack.c.l.b16 %v1509
        %v1624 = vunpack.c.l.b16 %v1510
        %v1625 = vunpack.c.l.b16 %v1511
        %v1626 = vunpack.c.l.b16 %v1512
        %v1627 = vunpack.c.l.b16 %v1513
        %v1628 = vunpack.c.l.b16 %v1514
        %v1629 = vunpack.c.l.b16 %v1515
        %v1630 = vunpack.c.l.b16 %v1516
        %v1631 = vpack.c.b16 %v1613, %v1612
        %v1632 = vpack.c.b16 %v1615, %v1614
        %v1633 = vpack.c.b16 %v1617, %v1616
        %v1634 = vpack.c.b16 %v1619, %v1618
        %v1635 = vpack.c.b16 %v1621, %v1620
        %v1636 = vpack.c.b16 %v1623, %v1622
        %v1637 = vpack.c.b16 %v1625, %v1624
        %v1638 = vpack.c.b16 %v1627, %v1626
        %v1639 = vpack.c.b16 %v1629, %v1628
        %v1640 = vpack.c.b16 %v1630, %v1630
        %v1651 = vsel %vm344, %v1570, 0
        %v1654 = vsel %vm344, %v1572, 0
        %v1657 = vsel %vm344, %v1574, 0
        %v1660 = vsel %vm344, %v1576, 0
        %v1663 = vsel %vm344, %v1578, 0
        %v1666 = vsel %vm344, %v1580, 0
        %v1669 = vsel %vm344, %v1582, 0
        %v1672 = vsel %vm344, %v1584, 0
        %v1675 = vand.u32 %v1640, %v372
        %1677 = vmatpush.bf16.msra.mxu0 %v1638
        %1678 = vmatpush.bf16.msra.mxu0 %v1637
        %1679 = vmatpush.bf16.msra.mxu0 %v1636
        %1680 = vmatpush.bf16.msra.mxu0 %v1635
        %1681 = vmatpush.bf16.msra.mxu0 %v1634
        %1682 = vmatpush.bf16.msra.mxu0 %v1633
        %1683 = vmatpush.bf16.msra.mxu0 %v1632
        %1684 = vmatpush.bf16.msra.mxu0 %v1631
        %1685 = vmatmul.bf16.gmra.mxu0 %v1569
        %v1686 = vpop.f32.mrf.mxu0
        %v1687 = vadd.f32 %v1519, %v1686
        %v1688 = vpop.f32.mrf.mxu0
        %v1689 = vadd.f32 %v1519, %v1688
        %1690 = vmatmul.bf16.gmra.mxu0 %v1571
        %v1691 = vpop.f32.mrf.mxu0
        %v1692 = vadd.f32 %v1519, %v1691
        %v1693 = vpop.f32.mrf.mxu0
        %v1694 = vadd.f32 %v1519, %v1693
        %1695 = vmatmul.bf16.gmra.mxu0 %v1573
        %v1696 = vpop.f32.mrf.mxu0
        %v1697 = vadd.f32 %v1519, %v1696
        %v1698 = vpop.f32.mrf.mxu0
        %v1699 = vadd.f32 %v1519, %v1698
        %1700 = vmatmul.bf16.gmra.mxu0 %v1575
        %v1701 = vpop.f32.mrf.mxu0
        %v1702 = vadd.f32 %v1519, %v1701
        %v1703 = vpop.f32.mrf.mxu0
        %v1704 = vadd.f32 %v1519, %v1703
        %1705 = vmatmul.bf16.gmra.mxu0 %v1577
        %v1706 = vpop.f32.mrf.mxu0
        %v1707 = vadd.f32 %v1519, %v1706
        %v1708 = vpop.f32.mrf.mxu0
        %v1709 = vadd.f32 %v1519, %v1708
        %1710 = vmatmul.bf16.gmra.mxu0 %v1579
        %v1711 = vpop.f32.mrf.mxu0
        %v1712 = vadd.f32 %v1519, %v1711
        %v1713 = vpop.f32.mrf.mxu0
        %v1714 = vadd.f32 %v1519, %v1713
        %1715 = vmatmul.bf16.gmra.mxu0 %v1581
        %v1716 = vpop.f32.mrf.mxu0
        %v1717 = vadd.f32 %v1519, %v1716
        %v1718 = vpop.f32.mrf.mxu0
        %v1719 = vadd.f32 %v1519, %v1718
        %1720 = vmatmul.bf16.gmra.mxu0 %v1583
        %v1721 = vpop.f32.mrf.mxu0
        %v1722 = vadd.f32 %v1519, %v1721
        %v1723 = vpop.f32.mrf.mxu0
        %v1724 = vadd.f32 %v1519, %v1723
        %1725 = vdwg.mxu0
        %1726 = vmatpush.bf16.msra.mxu0 0
        %1727 = vmatpush.bf16.msra.mxu0 0
        %1728 = vmatpush.bf16.msra.mxu0 0
        %1729 = vmatpush.bf16.msra.mxu0 0
        %1730 = vmatpush.bf16.msra.mxu0 0
        %1731 = vmatpush.bf16.msra.mxu0 0
        %1732 = vmatpush.bf16.msra.mxu0 %v1675
        %1733 = vmatpush.bf16.msra.mxu0 %v1639
        %1734 = vmatmul.bf16.gmra.mxu0 %v1651
        %v1735 = vpop.f32.mrf.mxu0
        %v1736 = vadd.f32 %v1687, %v1735
        %v1737 = vpop.f32.mrf.mxu0
        %v1738 = vadd.f32 %v1689, %v1737
        %1739 = vmatmul.bf16.gmra.mxu0 %v1654
        %v1740 = vpop.f32.mrf.mxu0
        %v1741 = vadd.f32 %v1692, %v1740
        %v1742 = vpop.f32.mrf.mxu0
        %v1743 = vadd.f32 %v1694, %v1742
        %1744 = vmatmul.bf16.gmra.mxu0 %v1657
        %v1745 = vpop.f32.mrf.mxu0
        %v1746 = vadd.f32 %v1697, %v1745
        %v1747 = vpop.f32.mrf.mxu0
        %v1748 = vadd.f32 %v1699, %v1747
        %1749 = vmatmul.bf16.gmra.mxu0 %v1660
        %v1750 = vpop.f32.mrf.mxu0
        %v1751 = vadd.f32 %v1702, %v1750
        %v1752 = vpop.f32.mrf.mxu0
        %v1753 = vadd.f32 %v1704, %v1752
        %1754 = vmatmul.bf16.gmra.mxu0 %v1663
        %v1755 = vpop.f32.mrf.mxu0
        %v1756 = vadd.f32 %v1707, %v1755
        %v1757 = vpop.f32.mrf.mxu0
        %v1758 = vadd.f32 %v1709, %v1757
        %1759 = vmatmul.bf16.gmra.mxu0 %v1666
        %v1760 = vpop.f32.mrf.mxu0
        %v1761 = vadd.f32 %v1712, %v1760
        %v1762 = vpop.f32.mrf.mxu0
        %v1763 = vadd.f32 %v1714, %v1762
        %1764 = vmatmul.bf16.gmra.mxu0 %v1669
        %v1765 = vpop.f32.mrf.mxu0
        %v1766 = vadd.f32 %v1717, %v1765
        %v1767 = vpop.f32.mrf.mxu0
        %v1768 = vadd.f32 %v1719, %v1767
        %1769 = vmatmul.bf16.gmra.mxu0 %v1672
        %v1770 = vpop.f32.mrf.mxu0
        %v1771 = vadd.f32 %v1722, %v1770
        %v1772 = vpop.f32.mrf.mxu0
        %v1773 = vadd.f32 %v1724, %v1772
        %1774 = vdwg.mxu0
        %v1775 = vpack.c.bf16 %v1736, %v1736
        %v1776 = vpack.c.bf16 %v1738, %v1738
        %v1777 = vpack.c.bf16 %v1741, %v1741
        %v1778 = vpack.c.bf16 %v1743, %v1743
        %v1779 = vpack.c.bf16 %v1746, %v1746
        %v1780 = vpack.c.bf16 %v1748, %v1748
        %v1781 = vpack.c.bf16 %v1751, %v1751
        %v1782 = vpack.c.bf16 %v1753, %v1753
        %v1783 = vpack.c.bf16 %v1756, %v1756
        %v1784 = vpack.c.bf16 %v1758, %v1758
        %v1785 = vpack.c.bf16 %v1761, %v1761
        %v1786 = vpack.c.bf16 %v1763, %v1763
        %v1787 = vpack.c.bf16 %v1766, %v1766
        %v1788 = vpack.c.bf16 %v1768, %v1768
        %v1789 = vpack.c.bf16 %v1771, %v1771
        %v1790 = vpack.c.bf16 %v1773, %v1773
        %1791 = vst.msk [vmem:[%s166 + $0x100] sm:$0xf] %vm490, %v1775
        %1792 = vst.msk [vmem:[%s166 + $0x104] sm:$0xf] %vm490, %v1776
        %1793 = vst.msk [vmem:[%s166 + $0x108] sm:$0xf] %vm490, %v1777
        %1794 = vst.msk [vmem:[%s166 + $0x10c] sm:$0xf] %vm490, %v1778
        %1795 = vst.msk [vmem:[%s166 + $0x110] sm:$0xf] %vm490, %v1779
        %1796 = vst.msk [vmem:[%s166 + $0x114] sm:$0xf] %vm490, %v1780
        %1797 = vst.msk [vmem:[%s166 + $0x118] sm:$0xf] %vm490, %v1781
        %1798 = vst.msk [vmem:[%s166 + $0x11c] sm:$0xf] %vm490, %v1782
        %1799 = vst.msk [vmem:[%s166 + $0x120] sm:$0xf] %vm490, %v1783
        %1800 = vst.msk [vmem:[%s166 + $0x124] sm:$0xf] %vm490, %v1784
        %1801 = vst.msk [vmem:[%s166 + $0x128] sm:$0xf] %vm490, %v1785
        %1802 = vst.msk [vmem:[%s166 + $0x12c] sm:$0xf] %vm490, %v1786
        %1803 = vst.msk [vmem:[%s166 + $0x130] sm:$0xf] %vm490, %v1787
        %1804 = vst.msk [vmem:[%s166 + $0x134] sm:$0xf] %vm490, %v1788
        %1805 = vst.msk [vmem:[%s166 + $0x138] sm:$0xf] %vm490, %v1789
        %1806 = vst.msk [vmem:[%s166 + $0x13c] sm:$0xf] %vm490, %v1790
        %v1807 = vld [vmem:[%s172 + $0x280] sm:$0xff]
        %v1808 = vld [vmem:[%s172 + $0x288] sm:$0xff]
        %v1809 = vld [vmem:[%s172 + $0x290] sm:$0xff]
        %v1810 = vld [vmem:[%s172 + $0x298] sm:$0xff]
        %v1811 = vld [vmem:[%s172 + $0x2a0] sm:$0xff]
        %v1812 = vld [vmem:[%s172 + $0x2a8] sm:$0xff]
        %v1813 = vld [vmem:[%s172 + $0x2b0] sm:$0xff]
        %v1814 = vld [vmem:[%s172 + $0x2b8] sm:$0xff]
        %v1815 = vld [vmem:[%s172 + $0x2c0] sm:$0xff]
        %v1816 = vld [vmem:[%s172 + $0x2c8] sm:$0xff]
        %v1817 = vld [vmem:[%s172 + $0x2d0] sm:$0xff]
        %v1818 = vld [vmem:[%s172 + $0x2d8] sm:$0xff]
        %v1819 = vld [vmem:[%s172 + $0x2e0] sm:$0xff]
        %v1820 = vld [vmem:[%s172 + $0x2e8] sm:$0xff]
        %v1821 = vld [vmem:[%s172 + $0x2f0] sm:$0xff]
        %v1822 = vld [vmem:[%s172 + $0x2f8] sm:$0xff]
        %v1823 = vld [vmem:[%s1] sm:$0xf]
        %v1824 = vld [vmem:[%s1 + $0x4] sm:$0xf]
        %v1825 = vld [vmem:[%s1 + $0x8] sm:$0xf]
        %v1826 = vld [vmem:[%s1 + $0xc] sm:$0xf]
        %v1827 = vld [vmem:[%s1 + $0x10] sm:$0xf]
        %v1828 = vld [vmem:[%s1 + $0x14] sm:$0xf]
        %v1829 = vld [vmem:[%s1 + $0x18] sm:$0xf]
        %v1830 = vld [vmem:[%s1 + $0x1c] sm:$0xf]
        %v1831 = vld [vmem:[%s1 + $0x20] sm:$0xf]
        %v1832 = vld [vmem:[%s1 + $0x24] sm:$0xf]
        %v1833 = vld [vmem:[%s1 + $0x28] sm:$0xf]
        %v1834 = vld [vmem:[%s1 + $0x2c] sm:$0xf]
        %v1835 = vld [vmem:[%s1 + $0x30] sm:$0xf]
        %v1836 = vld [vmem:[%s1 + $0x34] sm:$0xf]
        %v1837 = vld [vmem:[%s1 + $0x38] sm:$0xf]
        %v1838 = vld [vmem:[%s1 + $0x3c] sm:$0xf]
        %v1839 = vld [vmem:[%s1 + $0x40] sm:$0xf]
        %v1840 = vld [vmem:[%s1 + $0x44] sm:$0xf]
        %v1841 = vld [vmem:[%s1 + $0x48] sm:$0x3]
        %v1842 = vld [vmem:[%s2] sm:$0x1]
        %v1844 = vperm.slane %v1842, 0
        %v1862 = vunpack.c.l.b16 %v1807
        %v1863 = vunpack.c.h.b16 %v1807
        %v1864 = vunpack.c.l.b16 %v1808
        %v1865 = vunpack.c.h.b16 %v1808
        %v1866 = vunpack.c.l.b16 %v1809
        %v1867 = vunpack.c.h.b16 %v1809
        %v1868 = vunpack.c.l.b16 %v1810
        %v1869 = vunpack.c.h.b16 %v1810
        %v1870 = vunpack.c.l.b16 %v1811
        %v1871 = vunpack.c.h.b16 %v1811
        %v1872 = vunpack.c.l.b16 %v1812
        %v1873 = vunpack.c.h.b16 %v1812
        %v1874 = vunpack.c.l.b16 %v1813
        %v1875 = vunpack.c.h.b16 %v1813
        %v1876 = vunpack.c.l.b16 %v1814
        %v1877 = vunpack.c.h.b16 %v1814
        %v1878 = vunpack.c.l.b16 %v1815
        %v1879 = vunpack.c.h.b16 %v1815
        %v1880 = vunpack.c.l.b16 %v1816
        %v1881 = vunpack.c.h.b16 %v1816
        %v1882 = vunpack.c.l.b16 %v1817
        %v1883 = vunpack.c.h.b16 %v1817
        %v1884 = vunpack.c.l.b16 %v1818
        %v1885 = vunpack.c.h.b16 %v1818
        %v1886 = vunpack.c.l.b16 %v1819
        %v1887 = vunpack.c.h.b16 %v1819
        %v1888 = vunpack.c.l.b16 %v1820
        %v1889 = vunpack.c.h.b16 %v1820
        %v1890 = vunpack.c.l.b16 %v1821
        %v1891 = vunpack.c.h.b16 %v1821
        %v1892 = vunpack.c.l.b16 %v1822
        %v1893 = vunpack.c.h.b16 %v1822
        %v1894 = vpack.c.b16 %v1864, %v1862
        %v1895 = vpack.c.b16 %v1865, %v1863
        %v1896 = vpack.c.b16 %v1868, %v1866
        %v1897 = vpack.c.b16 %v1869, %v1867
        %v1898 = vpack.c.b16 %v1872, %v1870
        %v1899 = vpack.c.b16 %v1873, %v1871
        %v1900 = vpack.c.b16 %v1876, %v1874
        %v1901 = vpack.c.b16 %v1877, %v1875
        %v1902 = vpack.c.b16 %v1880, %v1878
        %v1903 = vpack.c.b16 %v1881, %v1879
        %v1904 = vpack.c.b16 %v1884, %v1882
        %v1905 = vpack.c.b16 %v1885, %v1883
        %v1906 = vpack.c.b16 %v1888, %v1886
        %v1907 = vpack.c.b16 %v1889, %v1887
        %v1908 = vpack.c.b16 %v1892, %v1890
        %v1909 = vpack.c.b16 %v1893, %v1891
        %v1937 = vunpack.c.l.b16 %v1823
        %v1938 = vunpack.c.l.b16 %v1824
        %v1939 = vunpack.c.l.b16 %v1825
        %v1940 = vunpack.c.l.b16 %v1826
        %v1941 = vunpack.c.l.b16 %v1827
        %v1942 = vunpack.c.l.b16 %v1828
        %v1943 = vunpack.c.l.b16 %v1829
        %v1944 = vunpack.c.l.b16 %v1830
        %v1945 = vunpack.c.l.b16 %v1831
        %v1946 = vunpack.c.l.b16 %v1832
        %v1947 = vunpack.c.l.b16 %v1833
        %v1948 = vunpack.c.l.b16 %v1834
        %v1949 = vunpack.c.l.b16 %v1835
        %v1950 = vunpack.c.l.b16 %v1836
        %v1951 = vunpack.c.l.b16 %v1837
        %v1952 = vunpack.c.l.b16 %v1838
        %v1953 = vunpack.c.l.b16 %v1839
        %v1954 = vunpack.c.l.b16 %v1840
        %v1955 = vunpack.c.l.b16 %v1841
        %v1956 = vpack.c.b16 %v1938, %v1937
        %v1957 = vpack.c.b16 %v1940, %v1939
        %v1958 = vpack.c.b16 %v1942, %v1941
        %v1959 = vpack.c.b16 %v1944, %v1943
        %v1960 = vpack.c.b16 %v1946, %v1945
        %v1961 = vpack.c.b16 %v1948, %v1947
        %v1962 = vpack.c.b16 %v1950, %v1949
        %v1963 = vpack.c.b16 %v1952, %v1951
        %v1964 = vpack.c.b16 %v1954, %v1953
        %v1965 = vpack.c.b16 %v1955, %v1955
        %v1976 = vsel %vm344, %v1895, 0
        %v1979 = vsel %vm344, %v1897, 0
        %v1982 = vsel %vm344, %v1899, 0
        %v1985 = vsel %vm344, %v1901, 0
        %v1988 = vsel %vm344, %v1903, 0
        %v1991 = vsel %vm344, %v1905, 0
        %v1994 = vsel %vm344, %v1907, 0
        %v1997 = vsel %vm344, %v1909, 0
        %v2000 = vand.u32 %v1965, %v372
        %2002 = vmatpush.bf16.msra.mxu0 %v1963
        %2003 = vmatpush.bf16.msra.mxu0 %v1962
        %2004 = vmatpush.bf16.msra.mxu0 %v1961
        %2005 = vmatpush.bf16.msra.mxu0 %v1960
        %2006 = vmatpush.bf16.msra.mxu0 %v1959
        %2007 = vmatpush.bf16.msra.mxu0 %v1958
        %2008 = vmatpush.bf16.msra.mxu0 %v1957
        %2009 = vmatpush.bf16.msra.mxu0 %v1956
        %2010 = vmatmul.bf16.gmra.mxu0 %v1894
        %v2011 = vpop.f32.mrf.mxu0
        %v2012 = vadd.f32 %v1844, %v2011
        %v2013 = vpop.f32.mrf.mxu0
        %v2014 = vadd.f32 %v1844, %v2013
        %2015 = vmatmul.bf16.gmra.mxu0 %v1896
        %v2016 = vpop.f32.mrf.mxu0
        %v2017 = vadd.f32 %v1844, %v2016
        %v2018 = vpop.f32.mrf.mxu0
        %v2019 = vadd.f32 %v1844, %v2018
        %2020 = vmatmul.bf16.gmra.mxu0 %v1898
        %v2021 = vpop.f32.mrf.mxu0
        %v2022 = vadd.f32 %v1844, %v2021
        %v2023 = vpop.f32.mrf.mxu0
        %v2024 = vadd.f32 %v1844, %v2023
        %2025 = vmatmul.bf16.gmra.mxu0 %v1900
        %v2026 = vpop.f32.mrf.mxu0
        %v2027 = vadd.f32 %v1844, %v2026
        %v2028 = vpop.f32.mrf.mxu0
        %v2029 = vadd.f32 %v1844, %v2028
        %2030 = vmatmul.bf16.gmra.mxu0 %v1902
        %v2031 = vpop.f32.mrf.mxu0
        %v2032 = vadd.f32 %v1844, %v2031
        %v2033 = vpop.f32.mrf.mxu0
        %v2034 = vadd.f32 %v1844, %v2033
        %2035 = vmatmul.bf16.gmra.mxu0 %v1904
        %v2036 = vpop.f32.mrf.mxu0
        %v2037 = vadd.f32 %v1844, %v2036
        %v2038 = vpop.f32.mrf.mxu0
        %v2039 = vadd.f32 %v1844, %v2038
        %2040 = vmatmul.bf16.gmra.mxu0 %v1906
        %v2041 = vpop.f32.mrf.mxu0
        %v2042 = vadd.f32 %v1844, %v2041
        %v2043 = vpop.f32.mrf.mxu0
        %v2044 = vadd.f32 %v1844, %v2043
        %2045 = vmatmul.bf16.gmra.mxu0 %v1908
        %v2046 = vpop.f32.mrf.mxu0
        %v2047 = vadd.f32 %v1844, %v2046
        %v2048 = vpop.f32.mrf.mxu0
        %v2049 = vadd.f32 %v1844, %v2048
        %2050 = vdwg.mxu0
        %2051 = vmatpush.bf16.msra.mxu0 0
        %2052 = vmatpush.bf16.msra.mxu0 0
        %2053 = vmatpush.bf16.msra.mxu0 0
        %2054 = vmatpush.bf16.msra.mxu0 0
        %2055 = vmatpush.bf16.msra.mxu0 0
        %2056 = vmatpush.bf16.msra.mxu0 0
        %2057 = vmatpush.bf16.msra.mxu0 %v2000
        %2058 = vmatpush.bf16.msra.mxu0 %v1964
        %2059 = vmatmul.bf16.gmra.mxu0 %v1976
        %v2060 = vpop.f32.mrf.mxu0
        %v2061 = vadd.f32 %v2012, %v2060
        %v2062 = vpop.f32.mrf.mxu0
        %v2063 = vadd.f32 %v2014, %v2062
        %2064 = vmatmul.bf16.gmra.mxu0 %v1979
        %v2065 = vpop.f32.mrf.mxu0
        %v2066 = vadd.f32 %v2017, %v2065
        %v2067 = vpop.f32.mrf.mxu0
        %v2068 = vadd.f32 %v2019, %v2067
        %2069 = vmatmul.bf16.gmra.mxu0 %v1982
        %v2070 = vpop.f32.mrf.mxu0
        %v2071 = vadd.f32 %v2022, %v2070
        %v2072 = vpop.f32.mrf.mxu0
        %v2073 = vadd.f32 %v2024, %v2072
        %2074 = vmatmul.bf16.gmra.mxu0 %v1985
        %v2075 = vpop.f32.mrf.mxu0
        %v2076 = vadd.f32 %v2027, %v2075
        %v2077 = vpop.f32.mrf.mxu0
        %v2078 = vadd.f32 %v2029, %v2077
        %2079 = vmatmul.bf16.gmra.mxu0 %v1988
        %v2080 = vpop.f32.mrf.mxu0
        %v2081 = vadd.f32 %v2032, %v2080
        %v2082 = vpop.f32.mrf.mxu0
        %v2083 = vadd.f32 %v2034, %v2082
        %2084 = vmatmul.bf16.gmra.mxu0 %v1991
        %v2085 = vpop.f32.mrf.mxu0
        %v2086 = vadd.f32 %v2037, %v2085
        %v2087 = vpop.f32.mrf.mxu0
        %v2088 = vadd.f32 %v2039, %v2087
        %2089 = vmatmul.bf16.gmra.mxu0 %v1994
        %v2090 = vpop.f32.mrf.mxu0
        %v2091 = vadd.f32 %v2042, %v2090
        %v2092 = vpop.f32.mrf.mxu0
        %v2093 = vadd.f32 %v2044, %v2092
        %2094 = vmatmul.bf16.gmra.mxu0 %v1997
        %v2095 = vpop.f32.mrf.mxu0
        %v2096 = vadd.f32 %v2047, %v2095
        %v2097 = vpop.f32.mrf.mxu0
        %v2098 = vadd.f32 %v2049, %v2097
        %2099 = vdwg.mxu0
        %v2100 = vpack.c.bf16 %v2061, %v2061
        %v2101 = vpack.c.bf16 %v2063, %v2063
        %v2102 = vpack.c.bf16 %v2066, %v2066
        %v2103 = vpack.c.bf16 %v2068, %v2068
        %v2104 = vpack.c.bf16 %v2071, %v2071
        %v2105 = vpack.c.bf16 %v2073, %v2073
        %v2106 = vpack.c.bf16 %v2076, %v2076
        %v2107 = vpack.c.bf16 %v2078, %v2078
        %v2108 = vpack.c.bf16 %v2081, %v2081
        %v2109 = vpack.c.bf16 %v2083, %v2083
        %v2110 = vpack.c.bf16 %v2086, %v2086
        %v2111 = vpack.c.bf16 %v2088, %v2088
        %v2112 = vpack.c.bf16 %v2091, %v2091
        %v2113 = vpack.c.bf16 %v2093, %v2093
        %v2114 = vpack.c.bf16 %v2096, %v2096
        %v2115 = vpack.c.bf16 %v2098, %v2098
        %2116 = vst.msk [vmem:[%s166 + $0x140] sm:$0xf] %vm490, %v2100
        %2117 = vst.msk [vmem:[%s166 + $0x144] sm:$0xf] %vm490, %v2101
        %2118 = vst.msk [vmem:[%s166 + $0x148] sm:$0xf] %vm490, %v2102
        %2119 = vst.msk [vmem:[%s166 + $0x14c] sm:$0xf] %vm490, %v2103
        %2120 = vst.msk [vmem:[%s166 + $0x150] sm:$0xf] %vm490, %v2104
        %2121 = vst.msk [vmem:[%s166 + $0x154] sm:$0xf] %vm490, %v2105
        %2122 = vst.msk [vmem:[%s166 + $0x158] sm:$0xf] %vm490, %v2106
        %2123 = vst.msk [vmem:[%s166 + $0x15c] sm:$0xf] %vm490, %v2107
        %2124 = vst.msk [vmem:[%s166 + $0x160] sm:$0xf] %vm490, %v2108
        %2125 = vst.msk [vmem:[%s166 + $0x164] sm:$0xf] %vm490, %v2109
        %2126 = vst.msk [vmem:[%s166 + $0x168] sm:$0xf] %vm490, %v2110
        %2127 = vst.msk [vmem:[%s166 + $0x16c] sm:$0xf] %vm490, %v2111
        %2128 = vst.msk [vmem:[%s166 + $0x170] sm:$0xf] %vm490, %v2112
        %2129 = vst.msk [vmem:[%s166 + $0x174] sm:$0xf] %vm490, %v2113
        %2130 = vst.msk [vmem:[%s166 + $0x178] sm:$0xf] %vm490, %v2114
        %2131 = vst.msk [vmem:[%s166 + $0x17c] sm:$0xf] %vm490, %v2115
        %v2132 = vld [vmem:[%s172 + $0x300] sm:$0xff]
        %v2133 = vld [vmem:[%s172 + $0x308] sm:$0xff]
        %v2134 = vld [vmem:[%s172 + $0x310] sm:$0xff]
        %v2135 = vld [vmem:[%s172 + $0x318] sm:$0xff]
        %v2136 = vld [vmem:[%s172 + $0x320] sm:$0xff]
        %v2137 = vld [vmem:[%s172 + $0x328] sm:$0xff]
        %v2138 = vld [vmem:[%s172 + $0x330] sm:$0xff]
        %v2139 = vld [vmem:[%s172 + $0x338] sm:$0xff]
        %v2140 = vld [vmem:[%s172 + $0x340] sm:$0xff]
        %v2141 = vld [vmem:[%s172 + $0x348] sm:$0xff]
        %v2142 = vld [vmem:[%s172 + $0x350] sm:$0xff]
        %v2143 = vld [vmem:[%s172 + $0x358] sm:$0xff]
        %v2144 = vld [vmem:[%s172 + $0x360] sm:$0xff]
        %v2145 = vld [vmem:[%s172 + $0x368] sm:$0xff]
        %v2146 = vld [vmem:[%s172 + $0x370] sm:$0xff]
        %v2147 = vld [vmem:[%s172 + $0x378] sm:$0xff]
        %v2148 = vld [vmem:[%s1] sm:$0xf]
        %v2149 = vld [vmem:[%s1 + $0x4] sm:$0xf]
        %v2150 = vld [vmem:[%s1 + $0x8] sm:$0xf]
        %v2151 = vld [vmem:[%s1 + $0xc] sm:$0xf]
        %v2152 = vld [vmem:[%s1 + $0x10] sm:$0xf]
        %v2153 = vld [vmem:[%s1 + $0x14] sm:$0xf]
        %v2154 = vld [vmem:[%s1 + $0x18] sm:$0xf]
        %v2155 = vld [vmem:[%s1 + $0x1c] sm:$0xf]
        %v2156 = vld [vmem:[%s1 + $0x20] sm:$0xf]
        %v2157 = vld [vmem:[%s1 + $0x24] sm:$0xf]
        %v2158 = vld [vmem:[%s1 + $0x28] sm:$0xf]
        %v2159 = vld [vmem:[%s1 + $0x2c] sm:$0xf]
        %v2160 = vld [vmem:[%s1 + $0x30] sm:$0xf]
        %v2161 = vld [vmem:[%s1 + $0x34] sm:$0xf]
        %v2162 = vld [vmem:[%s1 + $0x38] sm:$0xf]
        %v2163 = vld [vmem:[%s1 + $0x3c] sm:$0xf]
        %v2164 = vld [vmem:[%s1 + $0x40] sm:$0xf]
        %v2165 = vld [vmem:[%s1 + $0x44] sm:$0xf]
        %v2166 = vld [vmem:[%s1 + $0x48] sm:$0x3]
        %v2167 = vld [vmem:[%s2] sm:$0x1]
        %v2169 = vperm.slane %v2167, 0
        %v2187 = vunpack.c.l.b16 %v2132
        %v2188 = vunpack.c.h.b16 %v2132
        %v2189 = vunpack.c.l.b16 %v2133
        %v2190 = vunpack.c.h.b16 %v2133
        %v2191 = vunpack.c.l.b16 %v2134
        %v2192 = vunpack.c.h.b16 %v2134
        %v2193 = vunpack.c.l.b16 %v2135
        %v2194 = vunpack.c.h.b16 %v2135
        %v2195 = vunpack.c.l.b16 %v2136
        %v2196 = vunpack.c.h.b16 %v2136
        %v2197 = vunpack.c.l.b16 %v2137
        %v2198 = vunpack.c.h.b16 %v2137
        %v2199 = vunpack.c.l.b16 %v2138
        %v2200 = vunpack.c.h.b16 %v2138
        %v2201 = vunpack.c.l.b16 %v2139
        %v2202 = vunpack.c.h.b16 %v2139
        %v2203 = vunpack.c.l.b16 %v2140
        %v2204 = vunpack.c.h.b16 %v2140
        %v2205 = vunpack.c.l.b16 %v2141
        %v2206 = vunpack.c.h.b16 %v2141
        %v2207 = vunpack.c.l.b16 %v2142
        %v2208 = vunpack.c.h.b16 %v2142
        %v2209 = vunpack.c.l.b16 %v2143
        %v2210 = vunpack.c.h.b16 %v2143
        %v2211 = vunpack.c.l.b16 %v2144
        %v2212 = vunpack.c.h.b16 %v2144
        %v2213 = vunpack.c.l.b16 %v2145
        %v2214 = vunpack.c.h.b16 %v2145
        %v2215 = vunpack.c.l.b16 %v2146
        %v2216 = vunpack.c.h.b16 %v2146
        %v2217 = vunpack.c.l.b16 %v2147
        %v2218 = vunpack.c.h.b16 %v2147
        %v2219 = vpack.c.b16 %v2189, %v2187
        %v2220 = vpack.c.b16 %v2190, %v2188
        %v2221 = vpack.c.b16 %v2193, %v2191
        %v2222 = vpack.c.b16 %v2194, %v2192
        %v2223 = vpack.c.b16 %v2197, %v2195
        %v2224 = vpack.c.b16 %v2198, %v2196
        %v2225 = vpack.c.b16 %v2201, %v2199
        %v2226 = vpack.c.b16 %v2202, %v2200
        %v2227 = vpack.c.b16 %v2205, %v2203
        %v2228 = vpack.c.b16 %v2206, %v2204
        %v2229 = vpack.c.b16 %v2209, %v2207
        %v2230 = vpack.c.b16 %v2210, %v2208
        %v2231 = vpack.c.b16 %v2213, %v2211
        %v2232 = vpack.c.b16 %v2214, %v2212
        %v2233 = vpack.c.b16 %v2217, %v2215
        %v2234 = vpack.c.b16 %v2218, %v2216
        %v2262 = vunpack.c.l.b16 %v2148
        %v2263 = vunpack.c.l.b16 %v2149
        %v2264 = vunpack.c.l.b16 %v2150
        %v2265 = vunpack.c.l.b16 %v2151
        %v2266 = vunpack.c.l.b16 %v2152
        %v2267 = vunpack.c.l.b16 %v2153
        %v2268 = vunpack.c.l.b16 %v2154
        %v2269 = vunpack.c.l.b16 %v2155
        %v2270 = vunpack.c.l.b16 %v2156
        %v2271 = vunpack.c.l.b16 %v2157
        %v2272 = vunpack.c.l.b16 %v2158
        %v2273 = vunpack.c.l.b16 %v2159
        %v2274 = vunpack.c.l.b16 %v2160
        %v2275 = vunpack.c.l.b16 %v2161
        %v2276 = vunpack.c.l.b16 %v2162
        %v2277 = vunpack.c.l.b16 %v2163
        %v2278 = vunpack.c.l.b16 %v2164
        %v2279 = vunpack.c.l.b16 %v2165
        %v2280 = vunpack.c.l.b16 %v2166
        %v2281 = vpack.c.b16 %v2263, %v2262
        %v2282 = vpack.c.b16 %v2265, %v2264
        %v2283 = vpack.c.b16 %v2267, %v2266
        %v2284 = vpack.c.b16 %v2269, %v2268
        %v2285 = vpack.c.b16 %v2271, %v2270
        %v2286 = vpack.c.b16 %v2273, %v2272
        %v2287 = vpack.c.b16 %v2275, %v2274
        %v2288 = vpack.c.b16 %v2277, %v2276
        %v2289 = vpack.c.b16 %v2279, %v2278
        %v2290 = vpack.c.b16 %v2280, %v2280
        %v2301 = vsel %vm344, %v2220, 0
        %v2304 = vsel %vm344, %v2222, 0
        %v2307 = vsel %vm344, %v2224, 0
        %v2310 = vsel %vm344, %v2226, 0
        %v2313 = vsel %vm344, %v2228, 0
        %v2316 = vsel %vm344, %v2230, 0
        %v2319 = vsel %vm344, %v2232, 0
        %v2322 = vsel %vm344, %v2234, 0
        %v2325 = vand.u32 %v2290, %v372
        %2327 = vmatpush.bf16.msra.mxu0 %v2288
        %2328 = vmatpush.bf16.msra.mxu0 %v2287
        %2329 = vmatpush.bf16.msra.mxu0 %v2286
        %2330 = vmatpush.bf16.msra.mxu0 %v2285
        %2331 = vmatpush.bf16.msra.mxu0 %v2284
        %2332 = vmatpush.bf16.msra.mxu0 %v2283
        %2333 = vmatpush.bf16.msra.mxu0 %v2282
        %2334 = vmatpush.bf16.msra.mxu0 %v2281
        %2335 = vmatmul.bf16.gmra.mxu0 %v2219
        %v2336 = vpop.f32.mrf.mxu0
        %v2337 = vadd.f32 %v2169, %v2336
        %v2338 = vpop.f32.mrf.mxu0
        %v2339 = vadd.f32 %v2169, %v2338
        %2340 = vmatmul.bf16.gmra.mxu0 %v2221
        %v2341 = vpop.f32.mrf.mxu0
        %v2342 = vadd.f32 %v2169, %v2341
        %v2343 = vpop.f32.mrf.mxu0
        %v2344 = vadd.f32 %v2169, %v2343
        %2345 = vmatmul.bf16.gmra.mxu0 %v2223
        %v2346 = vpop.f32.mrf.mxu0
        %v2347 = vadd.f32 %v2169, %v2346
        %v2348 = vpop.f32.mrf.mxu0
        %v2349 = vadd.f32 %v2169, %v2348
        %2350 = vmatmul.bf16.gmra.mxu0 %v2225
        %v2351 = vpop.f32.mrf.mxu0
        %v2352 = vadd.f32 %v2169, %v2351
        %v2353 = vpop.f32.mrf.mxu0
        %v2354 = vadd.f32 %v2169, %v2353
        %2355 = vmatmul.bf16.gmra.mxu0 %v2227
        %v2356 = vpop.f32.mrf.mxu0
        %v2357 = vadd.f32 %v2169, %v2356
        %v2358 = vpop.f32.mrf.mxu0
        %v2359 = vadd.f32 %v2169, %v2358
        %2360 = vmatmul.bf16.gmra.mxu0 %v2229
        %v2361 = vpop.f32.mrf.mxu0
        %v2362 = vadd.f32 %v2169, %v2361
        %v2363 = vpop.f32.mrf.mxu0
        %v2364 = vadd.f32 %v2169, %v2363
        %2365 = vmatmul.bf16.gmra.mxu0 %v2231
        %v2366 = vpop.f32.mrf.mxu0
        %v2367 = vadd.f32 %v2169, %v2366
        %v2368 = vpop.f32.mrf.mxu0
        %v2369 = vadd.f32 %v2169, %v2368
        %2370 = vmatmul.bf16.gmra.mxu0 %v2233
        %v2371 = vpop.f32.mrf.mxu0
        %v2372 = vadd.f32 %v2169, %v2371
        %v2373 = vpop.f32.mrf.mxu0
        %v2374 = vadd.f32 %v2169, %v2373
        %2375 = vdwg.mxu0
        %2376 = vmatpush.bf16.msra.mxu0 0
        %2377 = vmatpush.bf16.msra.mxu0 0
        %2378 = vmatpush.bf16.msra.mxu0 0
        %2379 = vmatpush.bf16.msra.mxu0 0
        %2380 = vmatpush.bf16.msra.mxu0 0
        %2381 = vmatpush.bf16.msra.mxu0 0
        %2382 = vmatpush.bf16.msra.mxu0 %v2325
        %2383 = vmatpush.bf16.msra.mxu0 %v2289
        %2384 = vmatmul.bf16.gmra.mxu0 %v2301
        %v2385 = vpop.f32.mrf.mxu0
        %v2386 = vadd.f32 %v2337, %v2385
        %v2387 = vpop.f32.mrf.mxu0
        %v2388 = vadd.f32 %v2339, %v2387
        %2389 = vmatmul.bf16.gmra.mxu0 %v2304
        %v2390 = vpop.f32.mrf.mxu0
        %v2391 = vadd.f32 %v2342, %v2390
        %v2392 = vpop.f32.mrf.mxu0
        %v2393 = vadd.f32 %v2344, %v2392
        %2394 = vmatmul.bf16.gmra.mxu0 %v2307
        %v2395 = vpop.f32.mrf.mxu0
        %v2396 = vadd.f32 %v2347, %v2395
        %v2397 = vpop.f32.mrf.mxu0
        %v2398 = vadd.f32 %v2349, %v2397
        %2399 = vmatmul.bf16.gmra.mxu0 %v2310
        %v2400 = vpop.f32.mrf.mxu0
        %v2401 = vadd.f32 %v2352, %v2400
        %v2402 = vpop.f32.mrf.mxu0
        %v2403 = vadd.f32 %v2354, %v2402
        %2404 = vmatmul.bf16.gmra.mxu0 %v2313
        %v2405 = vpop.f32.mrf.mxu0
        %v2406 = vadd.f32 %v2357, %v2405
        %v2407 = vpop.f32.mrf.mxu0
        %v2408 = vadd.f32 %v2359, %v2407
        %2409 = vmatmul.bf16.gmra.mxu0 %v2316
        %v2410 = vpop.f32.mrf.mxu0
        %v2411 = vadd.f32 %v2362, %v2410
        %v2412 = vpop.f32.mrf.mxu0
        %v2413 = vadd.f32 %v2364, %v2412
        %2414 = vmatmul.bf16.gmra.mxu0 %v2319
        %v2415 = vpop.f32.mrf.mxu0
        %v2416 = vadd.f32 %v2367, %v2415
        %v2417 = vpop.f32.mrf.mxu0
        %v2418 = vadd.f32 %v2369, %v2417
        %2419 = vmatmul.bf16.gmra.mxu0 %v2322
        %v2420 = vpop.f32.mrf.mxu0
        %v2421 = vadd.f32 %v2372, %v2420
        %v2422 = vpop.f32.mrf.mxu0
        %v2423 = vadd.f32 %v2374, %v2422
        %2424 = vdwg.mxu0
        %v2425 = vpack.c.bf16 %v2386, %v2386
        %v2426 = vpack.c.bf16 %v2388, %v2388
        %v2427 = vpack.c.bf16 %v2391, %v2391
        %v2428 = vpack.c.bf16 %v2393, %v2393
        %v2429 = vpack.c.bf16 %v2396, %v2396
        %v2430 = vpack.c.bf16 %v2398, %v2398
        %v2431 = vpack.c.bf16 %v2401, %v2401
        %v2432 = vpack.c.bf16 %v2403, %v2403
        %v2433 = vpack.c.bf16 %v2406, %v2406
        %v2434 = vpack.c.bf16 %v2408, %v2408
        %v2435 = vpack.c.bf16 %v2411, %v2411
        %v2436 = vpack.c.bf16 %v2413, %v2413
        %v2437 = vpack.c.bf16 %v2416, %v2416
        %v2438 = vpack.c.bf16 %v2418, %v2418
        %v2439 = vpack.c.bf16 %v2421, %v2421
        %v2440 = vpack.c.bf16 %v2423, %v2423
        %2441 = vst.msk [vmem:[%s166 + $0x180] sm:$0xf] %vm490, %v2425
        %2442 = vst.msk [vmem:[%s166 + $0x184] sm:$0xf] %vm490, %v2426
        %2443 = vst.msk [vmem:[%s166 + $0x188] sm:$0xf] %vm490, %v2427
        %2444 = vst.msk [vmem:[%s166 + $0x18c] sm:$0xf] %vm490, %v2428
        %2445 = vst.msk [vmem:[%s166 + $0x190] sm:$0xf] %vm490, %v2429
        %2446 = vst.msk [vmem:[%s166 + $0x194] sm:$0xf] %vm490, %v2430
        %2447 = vst.msk [vmem:[%s166 + $0x198] sm:$0xf] %vm490, %v2431
        %2448 = vst.msk [vmem:[%s166 + $0x19c] sm:$0xf] %vm490, %v2432
        %2449 = vst.msk [vmem:[%s166 + $0x1a0] sm:$0xf] %vm490, %v2433
        %2450 = vst.msk [vmem:[%s166 + $0x1a4] sm:$0xf] %vm490, %v2434
        %2451 = vst.msk [vmem:[%s166 + $0x1a8] sm:$0xf] %vm490, %v2435
        %2452 = vst.msk [vmem:[%s166 + $0x1ac] sm:$0xf] %vm490, %v2436
        %2453 = vst.msk [vmem:[%s166 + $0x1b0] sm:$0xf] %vm490, %v2437
        %2454 = vst.msk [vmem:[%s166 + $0x1b4] sm:$0xf] %vm490, %v2438
        %2455 = vst.msk [vmem:[%s166 + $0x1b8] sm:$0xf] %vm490, %v2439
        %2456 = vst.msk [vmem:[%s166 + $0x1bc] sm:$0xf] %vm490, %v2440
        %v2457 = vld [vmem:[%s172 + $0x380] sm:$0xff]
        %v2458 = vld [vmem:[%s172 + $0x388] sm:$0xff]
        %v2459 = vld [vmem:[%s172 + $0x390] sm:$0xff]
        %v2460 = vld [vmem:[%s172 + $0x398] sm:$0xff]
        %v2461 = vld [vmem:[%s172 + $0x3a0] sm:$0xff]
        %v2462 = vld [vmem:[%s172 + $0x3a8] sm:$0xff]
        %v2463 = vld [vmem:[%s172 + $0x3b0] sm:$0xff]
        %v2464 = vld [vmem:[%s172 + $0x3b8] sm:$0xff]
        %v2465 = vld [vmem:[%s172 + $0x3c0] sm:$0xff]
        %v2466 = vld [vmem:[%s172 + $0x3c8] sm:$0xff]
        %v2467 = vld [vmem:[%s172 + $0x3d0] sm:$0xff]
        %v2468 = vld [vmem:[%s172 + $0x3d8] sm:$0xff]
        %v2469 = vld [vmem:[%s172 + $0x3e0] sm:$0xff]
        %v2470 = vld [vmem:[%s172 + $0x3e8] sm:$0xff]
        %v2471 = vld [vmem:[%s172 + $0x3f0] sm:$0xff]
        %v2472 = vld [vmem:[%s172 + $0x3f8] sm:$0xff]
        %v2473 = vld [vmem:[%s1] sm:$0xf]
        %v2474 = vld [vmem:[%s1 + $0x4] sm:$0xf]
        %v2475 = vld [vmem:[%s1 + $0x8] sm:$0xf]
        %v2476 = vld [vmem:[%s1 + $0xc] sm:$0xf]
        %v2477 = vld [vmem:[%s1 + $0x10] sm:$0xf]
        %v2478 = vld [vmem:[%s1 + $0x14] sm:$0xf]
        %v2479 = vld [vmem:[%s1 + $0x18] sm:$0xf]
        %v2480 = vld [vmem:[%s1 + $0x1c] sm:$0xf]
        %v2481 = vld [vmem:[%s1 + $0x20] sm:$0xf]
        %v2482 = vld [vmem:[%s1 + $0x24] sm:$0xf]
        %v2483 = vld [vmem:[%s1 + $0x28] sm:$0xf]
        %v2484 = vld [vmem:[%s1 + $0x2c] sm:$0xf]
        %v2485 = vld [vmem:[%s1 + $0x30] sm:$0xf]
        %v2486 = vld [vmem:[%s1 + $0x34] sm:$0xf]
        %v2487 = vld [vmem:[%s1 + $0x38] sm:$0xf]
        %v2488 = vld [vmem:[%s1 + $0x3c] sm:$0xf]
        %v2489 = vld [vmem:[%s1 + $0x40] sm:$0xf]
        %v2490 = vld [vmem:[%s1 + $0x44] sm:$0xf]
        %v2491 = vld [vmem:[%s1 + $0x48] sm:$0x3]
        %v2492 = vld [vmem:[%s2] sm:$0x1]
        %v2494 = vperm.slane %v2492, 0
        %v2512 = vunpack.c.l.b16 %v2457
        %v2513 = vunpack.c.h.b16 %v2457
        %v2514 = vunpack.c.l.b16 %v2458
        %v2515 = vunpack.c.h.b16 %v2458
        %v2516 = vunpack.c.l.b16 %v2459
        %v2517 = vunpack.c.h.b16 %v2459
        %v2518 = vunpack.c.l.b16 %v2460
        %v2519 = vunpack.c.h.b16 %v2460
        %v2520 = vunpack.c.l.b16 %v2461
        %v2521 = vunpack.c.h.b16 %v2461
        %v2522 = vunpack.c.l.b16 %v2462
        %v2523 = vunpack.c.h.b16 %v2462
        %v2524 = vunpack.c.l.b16 %v2463
        %v2525 = vunpack.c.h.b16 %v2463
        %v2526 = vunpack.c.l.b16 %v2464
        %v2527 = vunpack.c.h.b16 %v2464
        %v2528 = vunpack.c.l.b16 %v2465
        %v2529 = vunpack.c.h.b16 %v2465
        %v2530 = vunpack.c.l.b16 %v2466
        %v2531 = vunpack.c.h.b16 %v2466
        %v2532 = vunpack.c.l.b16 %v2467
        %v2533 = vunpack.c.h.b16 %v2467
        %v2534 = vunpack.c.l.b16 %v2468
        %v2535 = vunpack.c.h.b16 %v2468
        %v2536 = vunpack.c.l.b16 %v2469
        %v2537 = vunpack.c.h.b16 %v2469
        %v2538 = vunpack.c.l.b16 %v2470
        %v2539 = vunpack.c.h.b16 %v2470
        %v2540 = vunpack.c.l.b16 %v2471
        %v2541 = vunpack.c.h.b16 %v2471
        %v2542 = vunpack.c.l.b16 %v2472
        %v2543 = vunpack.c.h.b16 %v2472
        %v2544 = vpack.c.b16 %v2514, %v2512
        %v2545 = vpack.c.b16 %v2515, %v2513
        %v2546 = vpack.c.b16 %v2518, %v2516
        %v2547 = vpack.c.b16 %v2519, %v2517
        %v2548 = vpack.c.b16 %v2522, %v2520
        %v2549 = vpack.c.b16 %v2523, %v2521
        %v2550 = vpack.c.b16 %v2526, %v2524
        %v2551 = vpack.c.b16 %v2527, %v2525
        %v2552 = vpack.c.b16 %v2530, %v2528
        %v2553 = vpack.c.b16 %v2531, %v2529
        %v2554 = vpack.c.b16 %v2534, %v2532
        %v2555 = vpack.c.b16 %v2535, %v2533
        %v2556 = vpack.c.b16 %v2538, %v2536
        %v2557 = vpack.c.b16 %v2539, %v2537
        %v2558 = vpack.c.b16 %v2542, %v2540
        %v2559 = vpack.c.b16 %v2543, %v2541
        %v2587 = vunpack.c.l.b16 %v2473
        %v2588 = vunpack.c.l.b16 %v2474
        %v2589 = vunpack.c.l.b16 %v2475
        %v2590 = vunpack.c.l.b16 %v2476
        %v2591 = vunpack.c.l.b16 %v2477
        %v2592 = vunpack.c.l.b16 %v2478
        %v2593 = vunpack.c.l.b16 %v2479
        %v2594 = vunpack.c.l.b16 %v2480
        %v2595 = vunpack.c.l.b16 %v2481
        %v2596 = vunpack.c.l.b16 %v2482
        %v2597 = vunpack.c.l.b16 %v2483
        %v2598 = vunpack.c.l.b16 %v2484
        %v2599 = vunpack.c.l.b16 %v2485
        %v2600 = vunpack.c.l.b16 %v2486
        %v2601 = vunpack.c.l.b16 %v2487
        %v2602 = vunpack.c.l.b16 %v2488
        %v2603 = vunpack.c.l.b16 %v2489
        %v2604 = vunpack.c.l.b16 %v2490
        %v2605 = vunpack.c.l.b16 %v2491
        %v2606 = vpack.c.b16 %v2588, %v2587
        %v2607 = vpack.c.b16 %v2590, %v2589
        %v2608 = vpack.c.b16 %v2592, %v2591
        %v2609 = vpack.c.b16 %v2594, %v2593
        %v2610 = vpack.c.b16 %v2596, %v2595
        %v2611 = vpack.c.b16 %v2598, %v2597
        %v2612 = vpack.c.b16 %v2600, %v2599
        %v2613 = vpack.c.b16 %v2602, %v2601
        %v2614 = vpack.c.b16 %v2604, %v2603
        %v2615 = vpack.c.b16 %v2605, %v2605
        %v2626 = vsel %vm344, %v2545, 0
        %v2629 = vsel %vm344, %v2547, 0
        %v2632 = vsel %vm344, %v2549, 0
        %v2635 = vsel %vm344, %v2551, 0
        %v2638 = vsel %vm344, %v2553, 0
        %v2641 = vsel %vm344, %v2555, 0
        %v2644 = vsel %vm344, %v2557, 0
        %v2647 = vsel %vm344, %v2559, 0
        %v2650 = vand.u32 %v2615, %v372
        %2652 = vmatpush.bf16.msra.mxu0 %v2613
        %2653 = vmatpush.bf16.msra.mxu0 %v2612
        %2654 = vmatpush.bf16.msra.mxu0 %v2611
        %2655 = vmatpush.bf16.msra.mxu0 %v2610
        %2656 = vmatpush.bf16.msra.mxu0 %v2609
        %2657 = vmatpush.bf16.msra.mxu0 %v2608
        %2658 = vmatpush.bf16.msra.mxu0 %v2607
        %2659 = vmatpush.bf16.msra.mxu0 %v2606
        %2660 = vmatmul.bf16.gmra.mxu0 %v2544
        %v2661 = vpop.f32.mrf.mxu0
        %v2662 = vadd.f32 %v2494, %v2661
        %v2663 = vpop.f32.mrf.mxu0
        %v2664 = vadd.f32 %v2494, %v2663
        %2665 = vmatmul.bf16.gmra.mxu0 %v2546
        %v2666 = vpop.f32.mrf.mxu0
        %v2667 = vadd.f32 %v2494, %v2666
        %v2668 = vpop.f32.mrf.mxu0
        %v2669 = vadd.f32 %v2494, %v2668
        %2670 = vmatmul.bf16.gmra.mxu0 %v2548
        %v2671 = vpop.f32.mrf.mxu0
        %v2672 = vadd.f32 %v2494, %v2671
        %v2673 = vpop.f32.mrf.mxu0
        %v2674 = vadd.f32 %v2494, %v2673
        %2675 = vmatmul.bf16.gmra.mxu0 %v2550
        %v2676 = vpop.f32.mrf.mxu0
        %v2677 = vadd.f32 %v2494, %v2676
        %v2678 = vpop.f32.mrf.mxu0
        %v2679 = vadd.f32 %v2494, %v2678
        %2680 = vmatmul.bf16.gmra.mxu0 %v2552
        %v2681 = vpop.f32.mrf.mxu0
        %v2682 = vadd.f32 %v2494, %v2681
        %v2683 = vpop.f32.mrf.mxu0
        %v2684 = vadd.f32 %v2494, %v2683
        %2685 = vmatmul.bf16.gmra.mxu0 %v2554
        %v2686 = vpop.f32.mrf.mxu0
        %v2687 = vadd.f32 %v2494, %v2686
        %v2688 = vpop.f32.mrf.mxu0
        %v2689 = vadd.f32 %v2494, %v2688
        %2690 = vmatmul.bf16.gmra.mxu0 %v2556
        %v2691 = vpop.f32.mrf.mxu0
        %v2692 = vadd.f32 %v2494, %v2691
        %v2693 = vpop.f32.mrf.mxu0
        %v2694 = vadd.f32 %v2494, %v2693
        %2695 = vmatmul.bf16.gmra.mxu0 %v2558
        %v2696 = vpop.f32.mrf.mxu0
        %v2697 = vadd.f32 %v2494, %v2696
        %v2698 = vpop.f32.mrf.mxu0
        %v2699 = vadd.f32 %v2494, %v2698
        %2700 = vdwg.mxu0
        %2701 = vmatpush.bf16.msra.mxu0 0
        %2702 = vmatpush.bf16.msra.mxu0 0
        %2703 = vmatpush.bf16.msra.mxu0 0
        %2704 = vmatpush.bf16.msra.mxu0 0
        %2705 = vmatpush.bf16.msra.mxu0 0
        %2706 = vmatpush.bf16.msra.mxu0 0
        %2707 = vmatpush.bf16.msra.mxu0 %v2650
        %2708 = vmatpush.bf16.msra.mxu0 %v2614
        %2709 = vmatmul.bf16.gmra.mxu0 %v2626
        %v2710 = vpop.f32.mrf.mxu0
        %v2711 = vadd.f32 %v2662, %v2710
        %v2712 = vpop.f32.mrf.mxu0
        %v2713 = vadd.f32 %v2664, %v2712
        %2714 = vmatmul.bf16.gmra.mxu0 %v2629
        %v2715 = vpop.f32.mrf.mxu0
        %v2716 = vadd.f32 %v2667, %v2715
        %v2717 = vpop.f32.mrf.mxu0
        %v2718 = vadd.f32 %v2669, %v2717
        %2719 = vmatmul.bf16.gmra.mxu0 %v2632
        %v2720 = vpop.f32.mrf.mxu0
        %v2721 = vadd.f32 %v2672, %v2720
        %v2722 = vpop.f32.mrf.mxu0
        %v2723 = vadd.f32 %v2674, %v2722
        %2724 = vmatmul.bf16.gmra.mxu0 %v2635
        %v2725 = vpop.f32.mrf.mxu0
        %v2726 = vadd.f32 %v2677, %v2725
        %v2727 = vpop.f32.mrf.mxu0
        %v2728 = vadd.f32 %v2679, %v2727
        %2729 = vmatmul.bf16.gmra.mxu0 %v2638
        %v2730 = vpop.f32.mrf.mxu0
        %v2731 = vadd.f32 %v2682, %v2730
        %v2732 = vpop.f32.mrf.mxu0
        %v2733 = vadd.f32 %v2684, %v2732
        %2734 = vmatmul.bf16.gmra.mxu0 %v2641
        %v2735 = vpop.f32.mrf.mxu0
        %v2736 = vadd.f32 %v2687, %v2735
        %v2737 = vpop.f32.mrf.mxu0
        %v2738 = vadd.f32 %v2689, %v2737
        %2739 = vmatmul.bf16.gmra.mxu0 %v2644
        %v2740 = vpop.f32.mrf.mxu0
        %v2741 = vadd.f32 %v2692, %v2740
        %v2742 = vpop.f32.mrf.mxu0
        %v2743 = vadd.f32 %v2694, %v2742
        %2744 = vmatmul.bf16.gmra.mxu0 %v2647
        %v2745 = vpop.f32.mrf.mxu0
        %v2746 = vadd.f32 %v2697, %v2745
        %v2747 = vpop.f32.mrf.mxu0
        %v2748 = vadd.f32 %v2699, %v2747
        %2749 = vdwg.mxu0
        %v2750 = vpack.c.bf16 %v2711, %v2711
        %v2751 = vpack.c.bf16 %v2713, %v2713
        %v2752 = vpack.c.bf16 %v2716, %v2716
        %v2753 = vpack.c.bf16 %v2718, %v2718
        %v2754 = vpack.c.bf16 %v2721, %v2721
        %v2755 = vpack.c.bf16 %v2723, %v2723
        %v2756 = vpack.c.bf16 %v2726, %v2726
        %v2757 = vpack.c.bf16 %v2728, %v2728
        %v2758 = vpack.c.bf16 %v2731, %v2731
        %v2759 = vpack.c.bf16 %v2733, %v2733
        %v2760 = vpack.c.bf16 %v2736, %v2736
        %v2761 = vpack.c.bf16 %v2738, %v2738
        %v2762 = vpack.c.bf16 %v2741, %v2741
        %v2763 = vpack.c.bf16 %v2743, %v2743
        %v2764 = vpack.c.bf16 %v2746, %v2746
        %v2765 = vpack.c.bf16 %v2748, %v2748
        %2766 = vst.msk [vmem:[%s166 + $0x1c0] sm:$0xf] %vm490, %v2750
        %2767 = vst.msk [vmem:[%s166 + $0x1c4] sm:$0xf] %vm490, %v2751
        %2768 = vst.msk [vmem:[%s166 + $0x1c8] sm:$0xf] %vm490, %v2752
        %2769 = vst.msk [vmem:[%s166 + $0x1cc] sm:$0xf] %vm490, %v2753
        %2770 = vst.msk [vmem:[%s166 + $0x1d0] sm:$0xf] %vm490, %v2754
        %2771 = vst.msk [vmem:[%s166 + $0x1d4] sm:$0xf] %vm490, %v2755
        %2772 = vst.msk [vmem:[%s166 + $0x1d8] sm:$0xf] %vm490, %v2756
        %2773 = vst.msk [vmem:[%s166 + $0x1dc] sm:$0xf] %vm490, %v2757
        %2774 = vst.msk [vmem:[%s166 + $0x1e0] sm:$0xf] %vm490, %v2758
        %2775 = vst.msk [vmem:[%s166 + $0x1e4] sm:$0xf] %vm490, %v2759
        %2776 = vst.msk [vmem:[%s166 + $0x1e8] sm:$0xf] %vm490, %v2760
        %2777 = vst.msk [vmem:[%s166 + $0x1ec] sm:$0xf] %vm490, %v2761
        %2778 = vst.msk [vmem:[%s166 + $0x1f0] sm:$0xf] %vm490, %v2762
        %2779 = vst.msk [vmem:[%s166 + $0x1f4] sm:$0xf] %vm490, %v2763
        %2780 = vst.msk [vmem:[%s166 + $0x1f8] sm:$0xf] %vm490, %v2764
        %2781 = vst.msk [vmem:[%s166 + $0x1fc] sm:$0xf] %vm490, %v2765
        %s2782 = sand.u32 %s93, 1
        %s2783 = scalar_lea.sflag [#allocation3], %s2782
        %s2784 = sand.u32 %s93, 1
        %s2785 = smul.addr %s2784, 512
        %s2786 = scalar_lea.vmem [#allocation2], %s2785
        // Predicated region
        $region33: #{conv_im2col.1} parent=31 // pred_check
          %p2787 = pneg %p103
        $region34: #{conv_im2col.1} parent=31 // pred_check_branch
          %2789 = sbr.rel (%p2787) target = $region36
        $region35: #{conv_im2col.1} parent=31 // pred_region
          %s2790 = smul.u32 128, %s17
          %2792 = vsyncadd %s2783, 0
          %s2793 = smul.addr %s2790, 4
          %s2794 = scalar_lea.hbm %s3, %s2793
          %s2795 = sshll.u32 %s2786, 4
          %s2796 = int_to_ptr.vmem [resolvable:$true] %s2795
          %s2797 = sshll.u32 %s2794, 4
          %s2798 = int_to_ptr.hbm [resolvable:$true] %s2797
          %2803 = dma.vmem_to_hbm [thread:$0]  %s2796, 8192, %s2798, %s2783, 64, 64, 4
        $region36: #{conv_im2col.1} parent=31 // pred_fallthru
          _
      $region32: #{conv_im2col.1} parent=5 // pred_fallthru
        _
      %p2804 = scmp.le.s32.totalorder 2, %s12
      // Predicated region
      $region37: #{conv_im2col.1} parent=5 // pred_check
        %p2805 = pneg %p2804
      $region38: #{conv_im2col.1} parent=5 // pred_check_branch
        %2807 = sbr.rel (%p2805) target = $region40
      $region39: #{conv_im2col.1} parent=5 // pred_region
        %s2808 = ssub.s32 %s12, 2
        // Predicated region
        $region41: #{conv_im2col.1} parent=39 // pred_check
          %p2809 = pneg %p109
        $region42: #{conv_im2col.1} parent=39 // pred_check_branch
          %2811 = sbr.rel (%p2809) target = $region44
        $region43: #{conv_im2col.1} parent=39 // pred_region
          %s2812 = sand.u32 %s94, 1
          %s2813 = scalar_lea.sflag [#allocation3], %s2812
          %s2814 = sand.u32 %s94, 1
          %s2815 = smul.addr %s2814, 512
          %s2816 = scalar_lea.vmem [#allocation2], %s2815
          %2818 = dma.done %s2813, 8192
        $region44: #{conv_im2col.1} parent=39 // pred_fallthru
          _
      $region40: #{conv_im2col.1} parent=5 // pred_fallthru
        _
    $region6: #{conv_im2col.1} parent=1 // loop_footer
      %s16 = sadd.s32 1, %s12
    $region7: #{conv_im2col.1} parent=1 // loop_footer_branch
      %11 = sbr.rel target = $region3
    $region8: #{conv_im2col.1} parent=1 // loop_exit
      _
    %2819 = vsyncpa [#allocation3], 1
    %s2820 = scalar_lea.sflag [#allocation3], 1
    %2821 = vsyncpa %s2820, 1

</llo_original>
